<compile_context>
chip_gen: v6e
topology: v6e:2x2x1
jax: 0.10.0
libtpu: 0.0.40
codegen_flags: <defaults>
</compile_context>

<pallas_src>
import math

import jax
import jax.numpy as jnp
from jax.experimental import pallas as pl
from jax.experimental.pallas import tpu as pltpu

# ---- model hyper-parameters (small, consistent with a transformer block) ----
B = 2          # batch
S = 8          # sequence length
D = 32         # model dim
H = 4          # attention heads
HD = D // H    # head dim
FF = 4 * D     # MLP hidden dim
N_BLOCKS = 2   # TransformerTower(n_blocks=2)
EPS = 1e-5
SM_SCALE = 1.0 / math.sqrt(HD)

WA_COLS = 3 * D + D + FF   # Wqkv | Wo | W1 packed along lanes

# Token-tile parallel axis (use the 2nd TensorCore on v7x at non-toy sizes).
BATCH_TILES = 1
B_PER_TILE = B // BATCH_TILES
ROWS_PER_TILE = B_PER_TILE * S


def _layer_norm(v, g, b):
    mu = jnp.mean(v, axis=-1, keepdims=True)
    var = jnp.mean((v - mu) ** 2, axis=-1, keepdims=True)
    return (v - mu) * jax.lax.rsqrt(var + EPS) * g + b


def tower_kernel(
    x_hbm,        # (B*S, D) f32 in HBM (pl.ANY) -- consumed once at blk == 0
    wa_ref,       # (1, D, WA_COLS) bf16  : Wqkv | Wo | W1
    w2_ref,       # (1, FF, D)     bf16  : W2
    b_ref,        # (1, 8, 128)    f32   : LN gammas/betas + linear biases
    o_ref,        # (ROWS_PER_TILE, D) f32 -- resident across the block axis
):
    bt = pl.program_id(0)
    blk = pl.program_id(1)

    # One-time load of this tile's activation into the resident output block.
    @pl.when(blk == 0)
    def _():
        row0 = pl.multiple_of(bt * ROWS_PER_TILE, ROWS_PER_TILE)
        pltpu.sync_copy(x_hbm.at[pl.ds(row0, ROWS_PER_TILE), :], o_ref)

    wa = wa_ref[0]                  # (D, WA_COLS) bf16
    w2 = w2_ref[0]                  # (FF, D)      bf16
    bias = b_ref[0]                 # (8, 128)     f32

    wqkv = wa[:, 0:3 * D]           # (D, 3D)
    wo = wa[:, 3 * D:4 * D]         # (D, D)
    w1 = wa[:, 4 * D:4 * D + FF]    # (D, FF)
    ln1_g, ln1_b = bias[0, :D], bias[1, :D]
    b_qkv = bias[2, :3 * D]
    b_o = bias[3, :D]
    ln2_g, ln2_b = bias[4, :D], bias[5, :D]
    b_fc1 = bias[6, :FF]
    b_fc2 = bias[7, :D]

    x = o_ref[...]                  # (ROWS, D) f32

    # ---------------- attention sub-block (pre-LN) ----------------
    xn = _layer_norm(x, ln1_g, ln1_b)
    qkv = jnp.dot(xn.astype(jnp.bfloat16), wqkv,
                  preferred_element_type=jnp.float32) + b_qkv        # (ROWS, 3D) f32

    def to_heads(m):
        # (ROWS, D) -> (H*B_PER_TILE, S, HD) bf16; only lane slices + leading-dim
        # reshapes (no 4D transpose). Batch index = h*B_PER_TILE + b.
        return (jnp.stack([m[:, h * HD:(h + 1) * HD] for h in range(H)], axis=0)
                .reshape(H * B_PER_TILE, S, HD)
                .astype(jnp.bfloat16))

    q = to_heads(qkv[:, 0:D])
    k = to_heads(qkv[:, D:2 * D])
    v = to_heads(qkv[:, 2 * D:3 * D])

    # Batched score contraction + single softmax chain over every (head, batch).
    sc = jnp.einsum('bqd,bkd->bqk', q, k,
                    preferred_element_type=jnp.float32) * SM_SCALE   # (H*B, S, S) f32
    m = jnp.max(sc, axis=-1, keepdims=True)
    p = jnp.exp(sc - m)
    p = p * pl.reciprocal(jnp.sum(p, axis=-1, keepdims=True), approx=True)  # EUP divide

    oh = jnp.einsum('bqk,bkd->bqd', p.astype(jnp.bfloat16), v,
                    preferred_element_type=jnp.float32)              # (H*B, S, HD) f32

    # Assemble heads in registers (lane concat) -> (ROWS, D); no VMEM scratch.
    attn = jnp.concatenate(
        [oh[h * B_PER_TILE:(h + 1) * B_PER_TILE].reshape(ROWS_PER_TILE, HD)
         for h in range(H)], axis=-1)

    attn = jnp.dot(attn.astype(jnp.bfloat16), wo,
                   preferred_element_type=jnp.float32) + b_o
    x = x + attn

    # ---------------- MLP sub-block (pre-LN) ----------------
    xn2 = _layer_norm(x, ln2_g, ln2_b)
    z = jnp.dot(xn2.astype(jnp.bfloat16), w1,
                preferred_element_type=jnp.float32) + b_fc1
    z = jax.nn.gelu(z, approximate=True)  # TODO(synk): torch nn.GELU default is exact erf; tanh approx used here
    z = jnp.dot(z.astype(jnp.bfloat16), w2,
                preferred_element_type=jnp.float32) + b_fc2

    o_ref[...] = x + z


@jax.jit
def transformer_tower(x, wa_all, w2_all, bias_all):
    """Whole tower in a single pallas_call; grid = (batch tiles, blocks)."""
    b, s, d = x.shape
    x2 = x.reshape(b * s, d)
    n_blocks = wa_all.shape[0]

    out = pl.pallas_call(
        tower_kernel,
        out_shape=jax.ShapeDtypeStruct((b * s, d), jnp.float32),
        grid_spec=pltpu.PrefetchScalarGridSpec(
            num_scalar_prefetch=0,
            grid=(BATCH_TILES, n_blocks),
            in_specs=[
                pl.BlockSpec(memory_space=pl.ANY),                       # x: one-shot DMA
                pl.BlockSpec((1, D, WA_COLS), lambda bt, blk: (blk, 0, 0)),
                pl.BlockSpec((1, FF, D), lambda bt, blk: (blk, 0, 0)),
                pl.BlockSpec((1, 8, 128), lambda bt, blk: (blk, 0, 0)),
            ],
            out_specs=pl.BlockSpec((ROWS_PER_TILE, d), lambda bt, blk: (bt, 0)),
        ),
        compiler_params=pltpu.CompilerParams(
            # Block axis carries the resident activation; batch tiles are independent.
            dimension_semantics=("parallel", "arbitrary"),
            vmem_limit_bytes=32 * 1024 * 1024,
        ),
    )(x2, wa_all, w2_all, bias_all)
    return out.reshape(b, s, d)


def init_block_params(key):
    """One block's params packed into 3 slabs (trunc_normal-ish ~ N(0, .02))."""
    ks = jax.random.split(key, 4)
    wqkv = jax.random.normal(ks[0], (D, 3 * D)) * 0.02
    wo = jax.random.normal(ks[1], (D, D)) * 0.02
    w1 = jax.random.normal(ks[2], (D, FF)) * 0.02
    w2 = jax.random.normal(ks[3], (FF, D)) * 0.02

    wa = jnp.concatenate([wqkv, wo, w1], axis=1).astype(jnp.bfloat16)   # (D, WA_COLS)
    w2 = w2.astype(jnp.bfloat16)                                        # (FF, D)

    # f32 LN/bias slab: one (8, 128) vreg-tile; row layout matches the kernel.
    bias = jnp.zeros((8, 128), jnp.float32)
    bias = bias.at[0, :D].set(1.0)   # ln1 gamma  (row 1: ln1 beta = 0)
    bias = bias.at[4, :D].set(1.0)   # ln2 gamma  (row 5: ln2 beta = 0)
    # rows 2 (b_qkv), 3 (b_o), 6 (b_fc1), 7 (b_fc2) stay zero
    return wa, w2, bias


def init_tower_params(key):
    """Stack each slab on a leading (N_BLOCKS, ...) axis."""
    block_keys = jax.random.split(key, N_BLOCKS)
    per_block = [init_block_params(k) for k in block_keys]
    return tuple(jnp.stack([blk[j] for blk in per_block], axis=0) for j in range(3))


if __name__ == "__main__":
    root = jax.random.PRNGKey(0)
    x_key, p_key = jax.random.split(root)

    x = jax.random.normal(x_key, (B, S, D), dtype=jnp.float32)
    wa_all, w2_all, bias_all = init_tower_params(p_key)

    out = transformer_tower(x, wa_all, w2_all, bias_all)
    jax.block_until_ready(out)
    assert out.shape == (B, S, D) and out.dtype == jnp.float32
    assert bool(jnp.all(jnp.isfinite(out)))
    print("KERNEL_OK")
</pallas_src>

<mosaic_0001>
module attributes {stable_mosaic.version = 11 : i64} {
  func.func @tower_kernel(%arg0: i32, %arg1: i32, %arg2: memref<16x32xf32, #tpu.memory_space<any>>, %arg3: memref<1x32x256xbf16, #tpu.memory_space<vmem>>, %arg4: memref<1x128x32xbf16, #tpu.memory_space<vmem>>, %arg5: memref<1x8x128xf32, #tpu.memory_space<vmem>>, %arg6: memref<16x32xf32, #tpu.memory_space<vmem>>) attributes {dimension_semantics = [#tpu.dimension_semantics<parallel>, #tpu.dimension_semantics<arbitrary>], iteration_bounds = array<i64: 1, 2>, scalar_prefetch = 0 : i64, scratch_operands = 0 : i64, tpu.core_type = #tpu.core_type<tc>, window_params = [{}, {transform_indices = @transform_1, window_bounds = array<i64: 1, 32, 256>}, {transform_indices = @transform_2, window_bounds = array<i64: 1, 128, 32>}, {transform_indices = @transform_3, window_bounds = array<i64: 1, 8, 128>}, {transform_indices = @transform_4, window_bounds = array<i64: 16, 32>}]} {
    %c0_i32 = arith.constant 0 : i32
    %0 = arith.cmpi eq, %arg1, %c0_i32 : i32
    %1 = arith.extui %0 : i1 to i32
    %c0_i32_0 = arith.constant 0 : i32
    %2 = arith.cmpi ne, %1, %c0_i32_0 : i32
    scf.if %2 {
      %c16_i32 = arith.constant 16 : i32
      %173 = arith.muli %arg0, %c16_i32 : i32
      %174 = tpu.assume_multiple %173, 16 : i32
      "tpu.region"() ({
        %175 = tpu.sem_alloc : memref<!tpu.dma_semaphore, #tpu.memory_space<semaphore_mem>>
        %c0_i32_35 = arith.constant 0 : i32
        %176 = tpu.memref_slice %arg2[%174, %c0_i32_35] : memref<16x32xf32, #tpu.memory_space<any>> -> memref<16x32xf32, #tpu.memory_space<any>>
        tpu.enqueue_dma source(%176 : memref<16x32xf32, #tpu.memory_space<any>>) target(%arg6 : memref<16x32xf32, #tpu.memory_space<vmem>>) target_semaphore(%175 : memref<!tpu.dma_semaphore, #tpu.memory_space<semaphore_mem>>)
        %c0_i32_36 = arith.constant 0 : i32
        %177 = tpu.memref_slice %arg2[%174, %c0_i32_36] : memref<16x32xf32, #tpu.memory_space<any>> -> memref<16x32xf32, #tpu.memory_space<any>>
        tpu.wait_dma2 semaphore(%175 : memref<!tpu.dma_semaphore, #tpu.memory_space<semaphore_mem>>) src(%177 : memref<16x32xf32, #tpu.memory_space<any>>) dst(%arg6 : memref<16x32xf32, #tpu.memory_space<vmem>>)
        tpu.yield
      }) : () -> ()
    } else {
    }
    %c0 = arith.constant 0 : index
    %c0_1 = arith.constant 0 : index
    %c0_2 = arith.constant 0 : index
    %3 = vector.load %arg3[%c0, %c0_1, %c0_2] : memref<1x32x256xbf16, #tpu.memory_space<vmem>>, vector<1x32x256xbf16>
    %4 = vector.shape_cast %3 : vector<1x32x256xbf16> to vector<32x256xbf16>
    %c0_3 = arith.constant 0 : index
    %c0_4 = arith.constant 0 : index
    %c0_5 = arith.constant 0 : index
    %5 = vector.load %arg4[%c0_3, %c0_4, %c0_5] : memref<1x128x32xbf16, #tpu.memory_space<vmem>>, vector<1x128x32xbf16>
    %6 = vector.shape_cast %5 : vector<1x128x32xbf16> to vector<128x32xbf16>
    %c0_6 = arith.constant 0 : index
    %c0_7 = arith.constant 0 : index
    %c0_8 = arith.constant 0 : index
    %7 = vector.load %arg5[%c0_6, %c0_7, %c0_8] : memref<1x8x128xf32, #tpu.memory_space<vmem>>, vector<1x8x128xf32>
    %8 = vector.shape_cast %7 : vector<1x8x128xf32> to vector<8x128xf32>
    %9 = vector.extract_strided_slice %4 {offsets = [0, 0], sizes = [32, 96], strides = [1, 1]} : vector<32x256xbf16> to vector<32x96xbf16>
    %10 = vector.extract_strided_slice %4 {offsets = [0, 96], sizes = [32, 32], strides = [1, 1]} : vector<32x256xbf16> to vector<32x32xbf16>
    %11 = vector.extract_strided_slice %4 {offsets = [0, 128], sizes = [32, 128], strides = [1, 1]} : vector<32x256xbf16> to vector<32x128xbf16>
    %12 = vector.extract_strided_slice %8 {offsets = [0, 0], sizes = [1, 32], strides = [1, 1]} : vector<8x128xf32> to vector<1x32xf32>
    %13 = vector.shape_cast %12 : vector<1x32xf32> to vector<32xf32>
    %14 = vector.extract_strided_slice %8 {offsets = [1, 0], sizes = [1, 32], strides = [1, 1]} : vector<8x128xf32> to vector<1x32xf32>
    %15 = vector.shape_cast %14 : vector<1x32xf32> to vector<32xf32>
    %16 = vector.extract_strided_slice %8 {offsets = [2, 0], sizes = [1, 96], strides = [1, 1]} : vector<8x128xf32> to vector<1x96xf32>
    %17 = vector.shape_cast %16 : vector<1x96xf32> to vector<96xf32>
    %18 = vector.extract_strided_slice %8 {offsets = [3, 0], sizes = [1, 32], strides = [1, 1]} : vector<8x128xf32> to vector<1x32xf32>
    %19 = vector.shape_cast %18 : vector<1x32xf32> to vector<32xf32>
    %20 = vector.extract_strided_slice %8 {offsets = [4, 0], sizes = [1, 32], strides = [1, 1]} : vector<8x128xf32> to vector<1x32xf32>
    %21 = vector.shape_cast %20 : vector<1x32xf32> to vector<32xf32>
    %22 = vector.extract_strided_slice %8 {offsets = [5, 0], sizes = [1, 32], strides = [1, 1]} : vector<8x128xf32> to vector<1x32xf32>
    %23 = vector.shape_cast %22 : vector<1x32xf32> to vector<32xf32>
    %24 = vector.extract_strided_slice %8 {offsets = [6, 0], sizes = [1, 128], strides = [1, 1]} : vector<8x128xf32> to vector<1x128xf32>
    %25 = vector.shape_cast %24 : vector<1x128xf32> to vector<128xf32>
    %26 = vector.extract_strided_slice %8 {offsets = [7, 0], sizes = [1, 32], strides = [1, 1]} : vector<8x128xf32> to vector<1x32xf32>
    %27 = vector.shape_cast %26 : vector<1x32xf32> to vector<32xf32>
    %c0_9 = arith.constant 0 : index
    %c0_10 = arith.constant 0 : index
    %28 = vector.load %arg6[%c0_9, %c0_10] : memref<16x32xf32, #tpu.memory_space<vmem>>, vector<16x32xf32>
    %cst = arith.constant dense<0.000000e+00> : vector<16xf32>
    %29 = vector.multi_reduction <add>, %28, %cst [1] : vector<16x32xf32> to vector<16xf32>
    %30 = vector.shape_cast %29 : vector<16xf32> to vector<16x1xf32>
    %cst_11 = arith.constant 3.200000e+01 : f32
    %31 = vector.broadcast %cst_11 : f32 to vector<16x1xf32>
    %32 = arith.divf %30, %31 : vector<16x1xf32>
    %33 = vector.broadcast %32 : vector<16x1xf32> to vector<16x32xf32>
    %34 = arith.subf %28, %33 : vector<16x32xf32>
    %35 = arith.mulf %34, %34 : vector<16x32xf32>
    %cst_12 = arith.constant dense<0.000000e+00> : vector<16xf32>
    %36 = vector.multi_reduction <add>, %35, %cst_12 [1] : vector<16x32xf32> to vector<16xf32>
    %37 = vector.shape_cast %36 : vector<16xf32> to vector<16x1xf32>
    %cst_13 = arith.constant 3.200000e+01 : f32
    %38 = vector.broadcast %cst_13 : f32 to vector<16x1xf32>
    %39 = arith.divf %37, %38 : vector<16x1xf32>
    %40 = vector.broadcast %32 : vector<16x1xf32> to vector<16x32xf32>
    %41 = arith.subf %28, %40 : vector<16x32xf32>
    %cst_14 = arith.constant 9.99999974E-6 : f32
    %42 = vector.broadcast %cst_14 : f32 to vector<16x1xf32>
    %43 = arith.addf %39, %42 : vector<16x1xf32>
    %44 = math.rsqrt %43 : vector<16x1xf32>
    %45 = vector.broadcast %44 : vector<16x1xf32> to vector<16x32xf32>
    %46 = arith.mulf %41, %45 : vector<16x32xf32>
    %47 = vector.shape_cast %13 : vector<32xf32> to vector<1x32xf32>
    %48 = vector.broadcast %47 : vector<1x32xf32> to vector<16x32xf32>
    %49 = arith.mulf %46, %48 : vector<16x32xf32>
    %50 = vector.shape_cast %15 : vector<32xf32> to vector<1x32xf32>
    %51 = vector.broadcast %50 : vector<1x32xf32> to vector<16x32xf32>
    %52 = arith.addf %49, %51 : vector<16x32xf32>
    %53 = arith.truncf %52 : vector<16x32xf32> to vector<16x32xbf16>
    %cst_15 = arith.constant dense<0.000000e+00> : vector<16x96xf32>
    %54 = tpu.matmul %53, %9, %cst_15 {dimension_numbers = #tpu.dot_dimension_numbers<[1], [0], [0], [1], [0, 0, 1, 1], [], []>} : vector<16x32xbf16>, vector<32x96xbf16>, vector<16x96xf32> -> vector<16x96xf32>
    %55 = vector.shape_cast %17 : vector<96xf32> to vector<1x96xf32>
    %56 = vector.broadcast %55 : vector<1x96xf32> to vector<16x96xf32>
    %57 = arith.addf %54, %56 : vector<16x96xf32>
    %58 = vector.extract_strided_slice %57 {offsets = [0, 0], sizes = [16, 32], strides = [1, 1]} : vector<16x96xf32> to vector<16x32xf32>
    %59 = vector.extract_strided_slice %58 {offsets = [0, 0], sizes = [16, 8], strides = [1, 1]} : vector<16x32xf32> to vector<16x8xf32>
    %60 = vector.extract_strided_slice %58 {offsets = [0, 8], sizes = [16, 8], strides = [1, 1]} : vector<16x32xf32> to vector<16x8xf32>
    %61 = vector.extract_strided_slice %58 {offsets = [0, 16], sizes = [16, 8], strides = [1, 1]} : vector<16x32xf32> to vector<16x8xf32>
    %62 = vector.extract_strided_slice %58 {offsets = [0, 24], sizes = [16, 8], strides = [1, 1]} : vector<16x32xf32> to vector<16x8xf32>
    %63 = vector.shape_cast %59 : vector<16x8xf32> to vector<1x16x8xf32>
    %64 = vector.shape_cast %60 : vector<16x8xf32> to vector<1x16x8xf32>
    %65 = vector.shape_cast %61 : vector<16x8xf32> to vector<1x16x8xf32>
    %66 = vector.shape_cast %62 : vector<16x8xf32> to vector<1x16x8xf32>
    %67 = tpu.concatenate %63, %64, %65, %66 in 0 : vector<1x16x8xf32>, vector<1x16x8xf32>, vector<1x16x8xf32>, vector<1x16x8xf32> -> vector<4x16x8xf32>
    %68 = vector.shape_cast %67 : vector<4x16x8xf32> to vector<8x8x8xf32>
    %69 = arith.truncf %68 : vector<8x8x8xf32> to vector<8x8x8xbf16>
    %70 = vector.extract_strided_slice %57 {offsets = [0, 32], sizes = [16, 32], strides = [1, 1]} : vector<16x96xf32> to vector<16x32xf32>
    %71 = vector.extract_strided_slice %70 {offsets = [0, 0], sizes = [16, 8], strides = [1, 1]} : vector<16x32xf32> to vector<16x8xf32>
    %72 = vector.extract_strided_slice %70 {offsets = [0, 8], sizes = [16, 8], strides = [1, 1]} : vector<16x32xf32> to vector<16x8xf32>
    %73 = vector.extract_strided_slice %70 {offsets = [0, 16], sizes = [16, 8], strides = [1, 1]} : vector<16x32xf32> to vector<16x8xf32>
    %74 = vector.extract_strided_slice %70 {offsets = [0, 24], sizes = [16, 8], strides = [1, 1]} : vector<16x32xf32> to vector<16x8xf32>
    %75 = vector.shape_cast %71 : vector<16x8xf32> to vector<1x16x8xf32>
    %76 = vector.shape_cast %72 : vector<16x8xf32> to vector<1x16x8xf32>
    %77 = vector.shape_cast %73 : vector<16x8xf32> to vector<1x16x8xf32>
    %78 = vector.shape_cast %74 : vector<16x8xf32> to vector<1x16x8xf32>
    %79 = tpu.concatenate %75, %76, %77, %78 in 0 : vector<1x16x8xf32>, vector<1x16x8xf32>, vector<1x16x8xf32>, vector<1x16x8xf32> -> vector<4x16x8xf32>
    %80 = vector.shape_cast %79 : vector<4x16x8xf32> to vector<8x8x8xf32>
    %81 = arith.truncf %80 : vector<8x8x8xf32> to vector<8x8x8xbf16>
    %82 = vector.extract_strided_slice %57 {offsets = [0, 64], sizes = [16, 32], strides = [1, 1]} : vector<16x96xf32> to vector<16x32xf32>
    %83 = vector.extract_strided_slice %82 {offsets = [0, 0], sizes = [16, 8], strides = [1, 1]} : vector<16x32xf32> to vector<16x8xf32>
    %84 = vector.extract_strided_slice %82 {offsets = [0, 8], sizes = [16, 8], strides = [1, 1]} : vector<16x32xf32> to vector<16x8xf32>
    %85 = vector.extract_strided_slice %82 {offsets = [0, 16], sizes = [16, 8], strides = [1, 1]} : vector<16x32xf32> to vector<16x8xf32>
    %86 = vector.extract_strided_slice %82 {offsets = [0, 24], sizes = [16, 8], strides = [1, 1]} : vector<16x32xf32> to vector<16x8xf32>
    %87 = vector.shape_cast %83 : vector<16x8xf32> to vector<1x16x8xf32>
    %88 = vector.shape_cast %84 : vector<16x8xf32> to vector<1x16x8xf32>
    %89 = vector.shape_cast %85 : vector<16x8xf32> to vector<1x16x8xf32>
    %90 = vector.shape_cast %86 : vector<16x8xf32> to vector<1x16x8xf32>
    %91 = tpu.concatenate %87, %88, %89, %90 in 0 : vector<1x16x8xf32>, vector<1x16x8xf32>, vector<1x16x8xf32>, vector<1x16x8xf32> -> vector<4x16x8xf32>
    %92 = vector.shape_cast %91 : vector<4x16x8xf32> to vector<8x8x8xf32>
    %93 = arith.truncf %92 : vector<8x8x8xf32> to vector<8x8x8xbf16>
    "tpu.trace_start"() <{level = 10 : i32, message = "bqd,bkd->bqk"}> : () -> ()
    %cst_16 = arith.constant dense<0.000000e+00> : vector<8x8x8xf32>
    %94 = tpu.matmul %69, %81, %cst_16 {dimension_numbers = #tpu.dot_dimension_numbers<[2], [2], [1], [1], [0, 0, 0, 1, 1, 1], [0], [0]>} : vector<8x8x8xbf16>, vector<8x8x8xbf16>, vector<8x8x8xf32> -> vector<8x8x8xf32>
    "tpu.trace_stop"() : () -> ()
    %cst_17 = arith.constant 0.353553385 : f32
    %95 = vector.broadcast %cst_17 : f32 to vector<8x8x8xf32>
    %96 = arith.mulf %94, %95 : vector<8x8x8xf32>
    %cst_18 = arith.constant dense<0xFF800000> : vector<8x8xf32>
    %97 = vector.multi_reduction <maximumf>, %96, %cst_18 [2] : vector<8x8x8xf32> to vector<8x8xf32>
    %98 = vector.shape_cast %97 : vector<8x8xf32> to vector<8x8x1xf32>
    %99 = vector.broadcast %98 : vector<8x8x1xf32> to vector<8x8x8xf32>
    %100 = arith.subf %96, %99 : vector<8x8x8xf32>
    %101 = math.exp %100 : vector<8x8x8xf32>
    %cst_19 = arith.constant dense<0.000000e+00> : vector<8x8xf32>
    %102 = vector.multi_reduction <add>, %101, %cst_19 [2] : vector<8x8x8xf32> to vector<8x8xf32>
    %103 = vector.shape_cast %102 : vector<8x8xf32> to vector<8x8x1xf32>
    %104 = tpu.reciprocal %103 {approx = true} : vector<8x8x1xf32> -> vector<8x8x1xf32>
    %105 = vector.broadcast %104 : vector<8x8x1xf32> to vector<8x8x8xf32>
    %106 = arith.mulf %101, %105 : vector<8x8x8xf32>
    %107 = arith.truncf %106 : vector<8x8x8xf32> to vector<8x8x8xbf16>
    "tpu.trace_start"() <{level = 10 : i32, message = "bqk,bkd->bqd"}> : () -> ()
    %cst_20 = arith.constant dense<0.000000e+00> : vector<8x8x8xf32>
    %108 = tpu.matmul %107, %93, %cst_20 {dimension_numbers = #tpu.dot_dimension_numbers<[2], [1], [1], [2], [0, 0, 0, 1, 1, 2], [0], [0]>} : vector<8x8x8xbf16>, vector<8x8x8xbf16>, vector<8x8x8xf32> -> vector<8x8x8xf32>
    "tpu.trace_stop"() : () -> ()
    %109 = vector.extract_strided_slice %108 {offsets = [0, 0, 0], sizes = [2, 8, 8], strides = [1, 1, 1]} : vector<8x8x8xf32> to vector<2x8x8xf32>
    %110 = vector.shape_cast %109 : vector<2x8x8xf32> to vector<16x8xf32>
    %111 = vector.extract_strided_slice %108 {offsets = [2, 0, 0], sizes = [2, 8, 8], strides = [1, 1, 1]} : vector<8x8x8xf32> to vector<2x8x8xf32>
    %112 = vector.shape_cast %111 : vector<2x8x8xf32> to vector<16x8xf32>
    %113 = vector.extract_strided_slice %108 {offsets = [4, 0, 0], sizes = [2, 8, 8], strides = [1, 1, 1]} : vector<8x8x8xf32> to vector<2x8x8xf32>
    %114 = vector.shape_cast %113 : vector<2x8x8xf32> to vector<16x8xf32>
    %115 = vector.extract_strided_slice %108 {offsets = [6, 0, 0], sizes = [2, 8, 8], strides = [1, 1, 1]} : vector<8x8x8xf32> to vector<2x8x8xf32>
    %116 = vector.shape_cast %115 : vector<2x8x8xf32> to vector<16x8xf32>
    %117 = tpu.concatenate %110, %112, %114, %116 in 1 : vector<16x8xf32>, vector<16x8xf32>, vector<16x8xf32>, vector<16x8xf32> -> vector<16x32xf32>
    %118 = arith.truncf %117 : vector<16x32xf32> to vector<16x32xbf16>
    %cst_21 = arith.constant dense<0.000000e+00> : vector<16x32xf32>
    %119 = tpu.matmul %118, %10, %cst_21 {dimension_numbers = #tpu.dot_dimension_numbers<[1], [0], [0], [1], [0, 0, 1, 1], [], []>} : vector<16x32xbf16>, vector<32x32xbf16>, vector<16x32xf32> -> vector<16x32xf32>
    %120 = vector.shape_cast %19 : vector<32xf32> to vector<1x32xf32>
    %121 = vector.broadcast %120 : vector<1x32xf32> to vector<16x32xf32>
    %122 = arith.addf %119, %121 : vector<16x32xf32>
    %123 = arith.addf %28, %122 : vector<16x32xf32>
    %cst_22 = arith.constant dense<0.000000e+00> : vector<16xf32>
    %124 = vector.multi_reduction <add>, %123, %cst_22 [1] : vector<16x32xf32> to vector<16xf32>
    %125 = vector.shape_cast %124 : vector<16xf32> to vector<16x1xf32>
    %cst_23 = arith.constant 3.200000e+01 : f32
    %126 = vector.broadcast %cst_23 : f32 to vector<16x1xf32>
    %127 = arith.divf %125, %126 : vector<16x1xf32>
    %128 = vector.broadcast %127 : vector<16x1xf32> to vector<16x32xf32>
    %129 = arith.subf %123, %128 : vector<16x32xf32>
    %130 = arith.mulf %129, %129 : vector<16x32xf32>
    %cst_24 = arith.constant dense<0.000000e+00> : vector<16xf32>
    %131 = vector.multi_reduction <add>, %130, %cst_24 [1] : vector<16x32xf32> to vector<16xf32>
    %132 = vector.shape_cast %131 : vector<16xf32> to vector<16x1xf32>
    %cst_25 = arith.constant 3.200000e+01 : f32
    %133 = vector.broadcast %cst_25 : f32 to vector<16x1xf32>
    %134 = arith.divf %132, %133 : vector<16x1xf32>
    %135 = vector.broadcast %127 : vector<16x1xf32> to vector<16x32xf32>
    %136 = arith.subf %123, %135 : vector<16x32xf32>
    %cst_26 = arith.constant 9.99999974E-6 : f32
    %137 = vector.broadcast %cst_26 : f32 to vector<16x1xf32>
    %138 = arith.addf %134, %137 : vector<16x1xf32>
    %139 = math.rsqrt %138 : vector<16x1xf32>
    %140 = vector.broadcast %139 : vector<16x1xf32> to vector<16x32xf32>
    %141 = arith.mulf %136, %140 : vector<16x32xf32>
    %142 = vector.shape_cast %21 : vector<32xf32> to vector<1x32xf32>
    %143 = vector.broadcast %142 : vector<1x32xf32> to vector<16x32xf32>
    %144 = arith.mulf %141, %143 : vector<16x32xf32>
    %145 = vector.shape_cast %23 : vector<32xf32> to vector<1x32xf32>
    %146 = vector.broadcast %145 : vector<1x32xf32> to vector<16x32xf32>
    %147 = arith.addf %144, %146 : vector<16x32xf32>
    %148 = arith.truncf %147 : vector<16x32xf32> to vector<16x32xbf16>
    %cst_27 = arith.constant dense<0.000000e+00> : vector<16x128xf32>
    %149 = tpu.matmul %148, %11, %cst_27 {dimension_numbers = #tpu.dot_dimension_numbers<[1], [0], [0], [1], [0, 0, 1, 1], [], []>} : vector<16x32xbf16>, vector<32x128xbf16>, vector<16x128xf32> -> vector<16x128xf32>
    %150 = vector.shape_cast %25 : vector<128xf32> to vector<1x128xf32>
    %151 = vector.broadcast %150 : vector<1x128xf32> to vector<16x128xf32>
    %152 = arith.addf %149, %151 : vector<16x128xf32>
    %153 = arith.mulf %152, %152 : vector<16x128xf32>
    %154 = arith.mulf %152, %153 : vector<16x128xf32>
    %cst_28 = arith.constant 4.471500e-02 : f32
    %155 = vector.broadcast %cst_28 : f32 to vector<16x128xf32>
    %156 = arith.mulf %155, %154 : vector<16x128xf32>
    %157 = arith.addf %152, %156 : vector<16x128xf32>
    %cst_29 = arith.constant 0.797884583 : f32
    %158 = vector.broadcast %cst_29 : f32 to vector<16x128xf32>
    %159 = arith.mulf %158, %157 : vector<16x128xf32>
    %160 = math.tanh %159 : vector<16x128xf32>
    %cst_30 = arith.constant 1.000000e+00 : f32
    %161 = vector.broadcast %cst_30 : f32 to vector<16x128xf32>
    %162 = arith.addf %161, %160 : vector<16x128xf32>
    %cst_31 = arith.constant 5.000000e-01 : f32
    %163 = vector.broadcast %cst_31 : f32 to vector<16x128xf32>
    %164 = arith.mulf %163, %162 : vector<16x128xf32>
    %165 = arith.mulf %152, %164 : vector<16x128xf32>
    %166 = arith.truncf %165 : vector<16x128xf32> to vector<16x128xbf16>
    %cst_32 = arith.constant dense<0.000000e+00> : vector<16x32xf32>
    %167 = tpu.matmul %166, %6, %cst_32 {dimension_numbers = #tpu.dot_dimension_numbers<[1], [0], [0], [1], [0, 0, 1, 1], [], []>} : vector<16x128xbf16>, vector<128x32xbf16>, vector<16x32xf32> -> vector<16x32xf32>
    %168 = vector.shape_cast %27 : vector<32xf32> to vector<1x32xf32>
    %169 = vector.broadcast %168 : vector<1x32xf32> to vector<16x32xf32>
    %170 = arith.addf %167, %169 : vector<16x32xf32>
    %171 = arith.addf %123, %170 : vector<16x32xf32>
    %c0_33 = arith.constant 0 : index
    %c0_34 = arith.constant 0 : index
    %172 = vector.load %arg6[%c0_33, %c0_34] : memref<16x32xf32, #tpu.memory_space<vmem>>, vector<16x32xf32>
    tpu.vector_store %arg6[%c0_33, %c0_34], %171 {strides = array<i32>} : memref<16x32xf32, #tpu.memory_space<vmem>>, vector<16x32xf32>,
    return
  }
  func.func @transform_1(%arg0: i32, %arg1: i32) -> (i32, i32, i32) {
    %c0_i32 = arith.constant 0 : i32
    %c0_i32_0 = arith.constant 0 : i32
    %c0_i32_1 = arith.constant 0 : i32
    return %arg1, %c0_i32, %c0_i32_0 : i32, i32, i32
  }
  func.func @transform_2(%arg0: i32, %arg1: i32) -> (i32, i32, i32) {
    %c0_i32 = arith.constant 0 : i32
    %c0_i32_0 = arith.constant 0 : i32
    %c0_i32_1 = arith.constant 0 : i32
    return %arg1, %c0_i32, %c0_i32_0 : i32, i32, i32
  }
  func.func @transform_3(%arg0: i32, %arg1: i32) -> (i32, i32, i32) {
    %c0_i32 = arith.constant 0 : i32
    %c0_i32_0 = arith.constant 0 : i32
    %c0_i32_1 = arith.constant 0 : i32
    return %arg1, %c0_i32, %c0_i32_0 : i32, i32, i32
  }
  func.func @transform_4(%arg0: i32, %arg1: i32) -> (i32, i32) {
    %c0_i32 = arith.constant 0 : i32
    %c0_i32_0 = arith.constant 0 : i32
    return %arg0, %c0_i32 : i32, i32
  }
}

</mosaic_0001>

<llo_original>
// kernel: transformer_tower.1
$region0: #{transformer_tower.1}
  #allocation0 [shape = 'u32[]', space=smem, size = 0x4, offset = 0x4, fixed_abs, tag = 'smem constant byte address 0x4 - core index']
  #allocation1 [shape = 'u32[144,128]{1,0:T(1,128)}', space=vmem, size = 0x12000, scoped, tag = 'internal scratch']
  #allocation5 [shape = 's32[]', space=sflag, size = 0x4, offset = 0, fixed_abs, tag = 'sflag constant byte address 0x0 - dummy sync flag']
  %s0 = inlined_call_operand.vmem [shape: f32[16,32], index: 0, kind: input, shape index: {}]
  %s1 = inlined_call_operand.vmem [shape: bf16[2,32,256], index: 1, kind: input, shape index: {}]
  %s2 = inlined_call_operand.vmem [shape: bf16[2,128,32], index: 2, kind: input, shape index: {}]
  %s3 = inlined_call_operand.vmem [shape: f32[2,8,128], index: 3, kind: input, shape index: {}]
  %s4 = inlined_call_operand.hbm [shape: f32[16,32], index: 4, kind: output, shape index: {}]
  %s5 = sld [smem:[#allocation0]]
  $region84: #{transformer_tower.1} parent=0
    _
  %s7 = ssub.s32 1, %s5
  %s8 = scalar_select 0, %s7, %s5
  $region1: #{transformer_tower.1} parent=0
    #allocation2 [shape = 'u8[8192]{0}', space=vmem, size = 0x2000, scoped, tag = 'output window, operand 0, single buffered']
    #allocation3 [shape = 's32[2]{0}', space=sflag, size = 0x8, scoped, tag = 'scoped memory for transformer_tower.1']
    %9 = vsyncpa [#allocation3], 0
    loop: start=0, step=1, limit=4
    $region2: #{transformer_tower.1} parent=1 // loop_pre_header
      _
    $region3: #{transformer_tower.1} parent=1 // loop_header
      %s11 = sphi 0, %s15
      %p12 = scmp.ge.s32.totalorder %s11, 4
      %s18 = sphi 0, %s30
      %s19 = sphi 0, %s26
      %s20 = sphi 0, %s18
      %s21 = sphi 0, %s19
      %s22 = sphi 0, %s20
      %s23 = sphi 0, %s21
      %s33 = sphi 0, %s35
      %s36 = sphi 0, %s33
      %s37 = sphi 0, %s36
      %s53 = sphi 0, %s37
      %s59 = sphi 0, %s61
      %s62 = sphi 0, %s59
      %s63 = sphi 0, %s62
      %s79 = sphi 0, %s63
      %s85 = sphi 0, %s87
      %s88 = sphi 0, %s85
      %s89 = sphi 0, %s88
      %s105 = sphi 0, %s89
      %s111 = sphi 0, %s113
      %s114 = sphi 0, %s111
      %s115 = sphi 0, %s114
      %s131 = sphi 0, %s115
    $region4: #{transformer_tower.1} parent=1 // loop_header_branch
      %14 = sbr.rel (%p12) target = $region8
    $region5: #{transformer_tower.1} parent=1 // loop_body
      %s16 = ssub.s32 %s11, 1
      %s17 = ssub.s32 %s11, 2
      %s24 = sadd.s32 1, %s19
      %p25 = scmp.ge.s32.totalorder %s24, 2
      %s26 = scalar_select %p25, 0, %s24
      %s27 = sadd.s32 1, %s18
      %s28 = scalar_select %p25, %s27, %s18
      %p29 = scmp.ge.s32.totalorder %s28, 1
      %s30 = scalar_select %p29, 0, %s28
      %s31 = ssub.s32 %s19, %s26
      %p32 = scmp.eq.s32.totalorder %s31, 0
      %s34 = sadd.s32 %s33, 1
      %s35 = scalar_select %p32, %s33, %s34
      %p38 = pneg %p32
      %p39 = scmp.eq.s32.totalorder %s11, 1
      %p40 = por %p38, %p39
      %p41 = scmp.ne.s32.totalorder %s33, %s36
      %p42 = scmp.eq.s32.totalorder %s11, 0
      %p43 = por %p41, %p42
      %p44 = scmp.ne.s32.totalorder %s33, %s36
      %p45 = scmp.eq.s32.totalorder %s16, 1
      %p46 = por %p44, %p45
      %p47 = scmp.ne.s32.totalorder %s36, %s37
      %p48 = scmp.eq.s32.totalorder %s16, 0
      %p49 = por %p47, %p48
      %p50 = scmp.ne.s32.totalorder %s36, %s37
      %p51 = scmp.eq.s32.totalorder %s17, 1
      %p52 = por %p50, %p51
      %p54 = scmp.ne.s32.totalorder %s37, %s53
      %p55 = scmp.eq.s32.totalorder %s17, 0
      %p56 = por %p54, %p55
      %s57 = ssub.s32 %s19, %s26
      %p58 = scmp.eq.s32.totalorder %s57, 0
      %s60 = sadd.s32 %s59, 1
      %s61 = scalar_select %p58, %s59, %s60
      %p64 = pneg %p58
      %p65 = scmp.eq.s32.totalorder %s11, 1
      %p66 = por %p64, %p65
      %p67 = scmp.ne.s32.totalorder %s59, %s62
      %p68 = scmp.eq.s32.totalorder %s11, 0
      %p69 = por %p67, %p68
      %p70 = scmp.ne.s32.totalorder %s59, %s62
      %p71 = scmp.eq.s32.totalorder %s16, 1
      %p72 = por %p70, %p71
      %p73 = scmp.ne.s32.totalorder %s62, %s63
      %p74 = scmp.eq.s32.totalorder %s16, 0
      %p75 = por %p73, %p74
      %p76 = scmp.ne.s32.totalorder %s62, %s63
      %p77 = scmp.eq.s32.totalorder %s17, 1
      %p78 = por %p76, %p77
      %p80 = scmp.ne.s32.totalorder %s63, %s79
      %p81 = scmp.eq.s32.totalorder %s17, 0
      %p82 = por %p80, %p81
      %s83 = ssub.s32 %s19, %s26
      %p84 = scmp.eq.s32.totalorder %s83, 0
      %s86 = sadd.s32 %s85, 1
      %s87 = scalar_select %p84, %s85, %s86
      %p90 = pneg %p84
      %p91 = scmp.eq.s32.totalorder %s11, 1
      %p92 = por %p90, %p91
      %p93 = scmp.ne.s32.totalorder %s85, %s88
      %p94 = scmp.eq.s32.totalorder %s11, 0
      %p95 = por %p93, %p94
      %p96 = scmp.ne.s32.totalorder %s85, %s88
      %p97 = scmp.eq.s32.totalorder %s16, 1
      %p98 = por %p96, %p97
      %p99 = scmp.ne.s32.totalorder %s88, %s89
      %p100 = scmp.eq.s32.totalorder %s16, 0
      %p101 = por %p99, %p100
      %p102 = scmp.ne.s32.totalorder %s88, %s89
      %p103 = scmp.eq.s32.totalorder %s17, 1
      %p104 = por %p102, %p103
      %p106 = scmp.ne.s32.totalorder %s89, %s105
      %p107 = scmp.eq.s32.totalorder %s17, 0
      %p108 = por %p106, %p107
      %s109 = ssub.s32 %s18, %s30
      %p110 = scmp.eq.s32.totalorder %s109, 0
      %s112 = sadd.s32 %s111, 1
      %s113 = scalar_select %p110, %s111, %s112
      %p116 = pneg %p110
      %p117 = scmp.eq.s32.totalorder %s11, 1
      %p118 = por %p116, %p117
      %p119 = scmp.ne.s32.totalorder %s111, %s114
      %p120 = scmp.eq.s32.totalorder %s11, 0
      %p121 = por %p119, %p120
      %p122 = scmp.ne.s32.totalorder %s111, %s114
      %p123 = scmp.eq.s32.totalorder %s16, 1
      %p124 = por %p122, %p123
      %p125 = scmp.ne.s32.totalorder %s114, %s115
      %p126 = scmp.eq.s32.totalorder %s16, 0
      %p127 = por %p125, %p126
      %p128 = scmp.ne.s32.totalorder %s114, %s115
      %p129 = scmp.eq.s32.totalorder %s17, 1
      %p130 = por %p128, %p129
      %p132 = scmp.ne.s32.totalorder %s115, %s131
      %p133 = scmp.eq.s32.totalorder %s17, 0
      %p134 = por %p132, %p133
      %p135 = scmp.le.s32.totalorder 1, %s11
      %p136 = scmp.lt.s32.totalorder %s11, 3
      %p137 = pnand %p135, %p136
      %p138 = pneg %p137
      // Predicated region
      $region9: #{transformer_tower.1} parent=5 // pred_check
        _
      $region10: #{transformer_tower.1} parent=5 // pred_check_branch
        %140 = sbr.rel (%p137) target = $region12
      $region11: #{transformer_tower.1} parent=5 // pred_region
        %s141 = ssub.s32 %s11, 1
      $region12: #{transformer_tower.1} parent=5 // pred_fallthru
        _
      %p142 = scmp.lt.s32.totalorder %s11, 2
      // Predicated region
      $region13: #{transformer_tower.1} parent=5 // pred_check
        %p143 = pneg %p142
      $region14: #{transformer_tower.1} parent=5 // pred_check_branch
        %145 = sbr.rel (%p143) target = $region16
      $region15: #{transformer_tower.1} parent=5 // pred_region
        // Predicated region
        $region17: #{transformer_tower.1} parent=15 // pred_check
          %p146 = pneg %p43
        $region18: #{transformer_tower.1} parent=15 // pred_check_branch
          %148 = sbr.rel (%p146) target = $region20
        $region19: #{transformer_tower.1} parent=15 // pred_region
          %p149 = scmp.lt.s32.totalorder %s19, 1
          %s150 = scalar_select %p149, %s19, 1
          %s151 = smul.addr %s150, 8
          %s152 = smul.addr %s151, 4
          %s153 = scalar_lea.vmem %s1, %s152
        $region20: #{transformer_tower.1} parent=15 // pred_fallthru
          _
        // Predicated region
        $region21: #{transformer_tower.1} parent=15 // pred_check
          %p154 = pneg %p69
        $region22: #{transformer_tower.1} parent=15 // pred_check_branch
          %156 = sbr.rel (%p154) target = $region24
        $region23: #{transformer_tower.1} parent=15 // pred_region
          %p157 = scmp.lt.s32.totalorder %s19, 1
          %s158 = scalar_select %p157, %s19, 1
          %s159 = smul.addr %s158, 16
          %s160 = smul.addr %s159, 4
          %s161 = scalar_lea.vmem %s2, %s160
        $region24: #{transformer_tower.1} parent=15 // pred_fallthru
          _
        // Predicated region
        $region25: #{transformer_tower.1} parent=15 // pred_check
          %p162 = pneg %p95
        $region26: #{transformer_tower.1} parent=15 // pred_check_branch
          %164 = sbr.rel (%p162) target = $region28
        $region27: #{transformer_tower.1} parent=15 // pred_region
          %p165 = scmp.lt.s32.totalorder %s19, 1
          %s166 = scalar_select %p165, %s19, 1
          %s167 = smul.addr %s166, 8
          %s168 = scalar_lea.vmem %s3, %s167
        $region28: #{transformer_tower.1} parent=15 // pred_fallthru
          _
      $region16: #{transformer_tower.1} parent=5 // pred_fallthru
        _
      %p169 = scmp.le.s32.totalorder 1, %s11
      %p170 = scmp.lt.s32.totalorder %s11, 3
      %p171 = pnand %p169, %p170
      %p172 = pneg %p171
      // Predicated region
      $region29: #{transformer_tower.1} parent=5 // pred_check
        _
      $region30: #{transformer_tower.1} parent=5 // pred_check_branch
        %174 = sbr.rel (%p171) target = $region32
      $region31: #{transformer_tower.1} parent=5 // pred_region
        %s175 = ssub.s32 %s11, 1
        %p176 = scmp.lt.s32.totalorder %s21, 1
        %s177 = scalar_select %p176, %s21, 1
        %s178 = smul.addr %s177, 8
        %s179 = smul.addr %s178, 4
        %s180 = scalar_lea.vmem %s1, %s179
        %p181 = pneg %p49
        %p182 = pneg %p46
        %p183 = scmp.lt.s32.totalorder %s21, 1
        %s184 = scalar_select %p183, %s21, 1
        %s185 = smul.addr %s184, 16
        %s186 = smul.addr %s185, 4
        %s187 = scalar_lea.vmem %s2, %s186
        %p188 = pneg %p75
        %p189 = pneg %p72
        %p190 = scmp.lt.s32.totalorder %s21, 1
        %s191 = scalar_select %p190, %s21, 1
        %s192 = smul.addr %s191, 8
        %s193 = scalar_lea.vmem %s3, %s192
        %p194 = pneg %p101
        %p195 = pneg %p98
        %p196 = pneg %p127
        %p197 = pneg %p124
        %p198 = scmp.lt.s32.totalorder %s21, 1
        %s199 = scalar_select %p198, %s21, 1
        %s200 = smul.addr %s199, 8
        %s201 = smul.addr %s200, 4
        %s202 = scalar_lea.vmem %s1, %s201
        %p203 = scmp.lt.s32.totalorder %s21, 1
        %s204 = scalar_select %p203, %s21, 1
        %s205 = smul.addr %s204, 16
        %s206 = smul.addr %s205, 4
        %s207 = scalar_lea.vmem %s2, %s206
        %p208 = scmp.lt.s32.totalorder %s21, 1
        %s209 = scalar_select %p208, %s21, 1
        %s210 = smul.addr %s209, 8
        %s211 = scalar_lea.vmem %s3, %s210
        %s212 = smul.u32 2, %s20
        %p214 = scmp.eq.s32.totalorder %s21, 0
        // Predicated region
        $region33: #{transformer_tower.1} parent=31 // pred_check
          %p215 = pneg %p214
        $region34: #{transformer_tower.1} parent=31 // pred_check_branch
          %217 = sbr.rel (%p215) target = $region36
        $region35: #{transformer_tower.1} parent=31 // pred_region
          %s218 = smul.u32 %s20, 16
          $region37: #{transformer_tower.1} parent=35
            #allocation4 [shape = 's32[1]{0}', space=sflag, size = 0x4, scoped, tag = 'scoped memory for transformer_tower.1']
            %s219 = scalar_lea.vmem %s0, %s218
            %p221 = scmp.lt.u32.totalorder 16, 8
            %p222 = pneg %p221
            // Predicated region
            $region38: #{transformer_tower.1} parent=37 // pred_check
              _
            $region39: #{transformer_tower.1} parent=37 // pred_check_branch
              %224 = sbr.rel (%p221) target = $region41
            $region40: #{transformer_tower.1} parent=37 // pred_region
              %s240 = sand.u32 16, 7
              %p241 = scmp.eq.s32.totalorder %s240, 0
              // Predicated region
              $region53: #{transformer_tower.1} parent=40 // pred_check
                %p242 = pneg %p241
              $region54: #{transformer_tower.1} parent=40 // pred_check_branch
                %244 = sbr.rel (%p242) target = $region56
              $region55: #{transformer_tower.1} parent=40 // pred_region
                loop: start=0, step=1, limit=1
                $region57: #{transformer_tower.1} parent=55 // loop_pre_header
                  _
                $region58: #{transformer_tower.1} parent=55 // loop_header
                  %s246 = sphi 0, %s250
                  %p247 = scmp.ge.s32.totalorder %s246, 1
                  %s251 = sphi %s219, %s219
                  %s252 = sphi [#allocation2], [#allocation2]
                $region59: #{transformer_tower.1} parent=55 // loop_header_branch
                  %249 = sbr.rel (%p247) target = $region63
                $region60: #{transformer_tower.1} parent=55 // loop_body
                  %v253 = vld [vmem:[%s251] sm:$0xff]
                  %254 = vst [vmem:[%s252] sm:$0xff] %v253
                  %v255 = vld [vmem:[%s251 + $0x8] sm:$0xff]
                  %256 = vst [vmem:[%s252 + $0x8] sm:$0xff] %v255
                $region61: #{transformer_tower.1} parent=55 // loop_footer
                  %s250 = sadd.s32 1, %s246
                $region62: #{transformer_tower.1} parent=55 // loop_footer_branch
                  %245 = sbr.rel target = $region58
                $region63: #{transformer_tower.1} parent=55 // loop_exit
                  _
              $region56: #{transformer_tower.1} parent=40 // pred_fallthru
                _
              %p257 = pneg %p241
              // Predicated region
              $region64: #{transformer_tower.1} parent=40 // pred_check
                _
              $region65: #{transformer_tower.1} parent=40 // pred_check_branch
                %259 = sbr.rel (%p241) target = $region67
              $region66: #{transformer_tower.1} parent=40 // pred_region
                %s260 = sand.u32 16, 7
              $region67: #{transformer_tower.1} parent=40 // pred_fallthru
                _
            $region41: #{transformer_tower.1} parent=37 // pred_fallthru
              _
            // Predicated region
            $region42: #{transformer_tower.1} parent=37 // pred_check
              %p225 = pneg %p221
            $region43: #{transformer_tower.1} parent=37 // pred_check_branch
              %227 = sbr.rel (%p225) target = $region45
            $region44: #{transformer_tower.1} parent=37 // pred_region
              %s228 = sshll.u32 1, 16
              %s229 = ssub.s32 %s228, 1
              loop: start=0, step=1, limit=1
              $region46: #{transformer_tower.1} parent=44 // loop_pre_header
                _
              $region47: #{transformer_tower.1} parent=44 // loop_header
                %s231 = sphi 0, %s235
                %p232 = scmp.ge.s32.totalorder %s231, 1
                %s236 = sphi %s219, %s219
                %s237 = sphi [#allocation2], [#allocation2]
              $region48: #{transformer_tower.1} parent=44 // loop_header_branch
                %234 = sbr.rel (%p232) target = $region52
              $region49: #{transformer_tower.1} parent=44 // loop_body
                %v238 = vld [vmem:[%s236] sm:%s229]
                %239 = vst [vmem:[%s237] sm:%s229] %v238
              $region50: #{transformer_tower.1} parent=44 // loop_footer
                %s235 = sadd.s32 1, %s231
              $region51: #{transformer_tower.1} parent=44 // loop_footer_branch
                %230 = sbr.rel target = $region47
              $region52: #{transformer_tower.1} parent=44 // loop_exit
                _
            $region45: #{transformer_tower.1} parent=37 // pred_fallthru
              _
            // Predicated region
            $region68: #{transformer_tower.1} parent=37 // pred_check
              _
            $region69: #{transformer_tower.1} parent=37 // pred_check_branch
              %263 = sbr.rel (0) target = $region71
            $region70: #{transformer_tower.1} parent=37 // pred_region
              %264 = vsyncadd [#allocation4], 256
            $region71: #{transformer_tower.1} parent=37 // pred_fallthru
              _
            %s265 = smul.u32 16, 1
            %s266 = sshll.u32 %s265, 4
            %267 = dma.done [#allocation4], %s266
        $region36: #{transformer_tower.1} parent=31 // pred_fallthru
          _
        %v268 = vld [vmem:[%s202] sm:$0xff]
        %v269 = vld [vmem:[%s202 + $0x8] sm:$0xff]
        %v270 = vld [vmem:[%s202 + $0x10] sm:$0xff]
        %v271 = vld [vmem:[%s202 + $0x18] sm:$0xff]
        %v272 = vld [vmem:[%s207] sm:$0xf]
        %v273 = vld [vmem:[%s207 + $0x4] sm:$0xf]
        %v274 = vld [vmem:[%s207 + $0x8] sm:$0xf]
        %v275 = vld [vmem:[%s207 + $0xc] sm:$0xf]
        %v276 = vld [vmem:[%s207 + $0x10] sm:$0xf]
        %v277 = vld [vmem:[%s207 + $0x14] sm:$0xf]
        %v278 = vld [vmem:[%s207 + $0x18] sm:$0xf]
        %v279 = vld [vmem:[%s207 + $0x1c] sm:$0xf]
        %v280 = vld [vmem:[%s207 + $0x20] sm:$0xf]
        %v281 = vld [vmem:[%s207 + $0x24] sm:$0xf]
        %v282 = vld [vmem:[%s207 + $0x28] sm:$0xf]
        %v283 = vld [vmem:[%s207 + $0x2c] sm:$0xf]
        %v284 = vld [vmem:[%s207 + $0x30] sm:$0xf]
        %v285 = vld [vmem:[%s207 + $0x34] sm:$0xf]
        %v286 = vld [vmem:[%s207 + $0x38] sm:$0xf]
        %v287 = vld [vmem:[%s207 + $0x3c] sm:$0xf]
        %v288 = vld [vmem:[%s211] sm:$0xff]
        %v289 = vld [vmem:[#allocation2] sm:$0xff]
        %v290 = vld [vmem:[#allocation2 + $0x8] sm:$0xff]
        %vm291 = vcmask 261120
        %v292 = vsel %vm291, %v289, 0.0
        %293 = vadd.xlane.f32.xlu0 %v292
        %v294 = vpop.xlane.xlu0 %293
        %v295 = vsel %vm291, %v290, 0.0
        %296 = vadd.xlane.f32.xlu0 %v295
        %v297 = vpop.xlane.xlu0 %296
        %v298 = vrcp.pop 32.0
        %v299 = vmul.f32 %v294, %v298
        %v300 = vmul.f32 %v297, %v298
        %v301 = vsub.f32 %v289, %v299
        %v302 = vsub.f32 %v290, %v300
        %v303 = vmul.f32 %v301, %v301
        %v304 = vmul.f32 %v302, %v302
        %v305 = vsel %vm291, %v303, 0.0
        %306 = vadd.xlane.f32.xlu0 %v305
        %v307 = vpop.xlane.xlu0 %306
        %v308 = vsel %vm291, %v304, 0.0
        %309 = vadd.xlane.f32.xlu0 %v308
        %v310 = vpop.xlane.xlu0 %309
        %v311 = vmul.f32 %v307, %v298
        %v312 = vmul.f32 %v310, %v298
        %v313 = vadd.f32 %v311, 1e-05
        %v314 = vadd.f32 %v312, 1e-05
        %v315 = vrsqrt.pop %v313
        %v316 = vrsqrt.pop %v314
        %v317 = vmul.f32 %v301, %v315
        %v318 = vmul.f32 %v302, %v316
        %v319 = vlaneseq
        %v320 = vshrl.u32 %v319, 7
        %v321 = vsub.s32 0, %v320
        %v322 = vrot.slane %v288, %v321
        %v323 = vmul.f32 %v317, %v322
        %v324 = vmul.f32 %v318, %v322
        %v325 = vlaneseq
        %v326 = vshrl.u32 %v325, 7
        %v327 = vsub.s32 1, %v326
        %v328 = vrot.slane %v288, %v327
        %v329 = vadd.f32 %v323, %v328
        %v330 = vadd.f32 %v324, %v328
        %v331 = vpack.c.bf16 %v330, %v329
        %v332 = vlaneseq
        %v333 = vshrl.u32 %v332, 7
        %v334 = vsub.s32 2, %v333
        %v335 = vrot.slane %v288, %v334
        %v340 = vunpack.c.l.b16 %v268
        %v341 = vunpack.c.l.b16 %v269
        %v342 = vunpack.c.l.b16 %v270
        %v343 = vunpack.c.l.b16 %v271
        %v344 = vpack.c.b16 %v341, %v340
        %v345 = vpack.c.b16 %v343, %v342
        %v349 = vsel %vm291, %v331, 0
        %351 = vmatprep.subr.bf16.mxu0 0
        %352 = vmatpush1.bf16.msra.mxu0 0
        %353 = vmatprep.subr.bf16.mxu0 0
        %354 = vmatpush1.bf16.msra.mxu0 0
        %355 = vmatprep.subr.bf16.mxu0 0
        %356 = vmatpush1.bf16.msra.mxu0 0
        %357 = vmatprep.subr.bf16.mxu0 0
        %358 = vmatpush1.bf16.msra.mxu0 0
        %359 = vmatprep.subr.bf16.mxu0 0
        %360 = vmatpush1.bf16.msra.mxu0 0
        %361 = vmatprep.subr.bf16.mxu0 0
        %362 = vmatpush1.bf16.msra.mxu0 0
        %363 = vmatprep.subr.bf16.mxu0 0
        %364 = vmatpush1.bf16.msra.mxu0 %v345
        %365 = vmatprep.subr.bf16.mxu0 0
        %366 = vmatpush1.bf16.msra.mxu0 %v344
        %367 = vmatprep.subr.bf16.mxu0 0
        %368 = vmatpush2.bf16.msra.mxu0 0
        %369 = vmatprep.subr.bf16.mxu0 0
        %370 = vmatpush2.bf16.msra.mxu0 0
        %371 = vmatprep.subr.bf16.mxu0 0
        %372 = vmatpush2.bf16.msra.mxu0 0
        %373 = vmatprep.subr.bf16.mxu0 0
        %374 = vmatpush2.bf16.msra.mxu0 0
        %375 = vmatprep.subr.bf16.mxu0 0
        %376 = vmatpush2.bf16.msra.mxu0 0
        %377 = vmatprep.subr.bf16.mxu0 0
        %378 = vmatpush2.bf16.msra.mxu0 0
        %379 = vmatprep.subr.bf16.mxu0 0
        %380 = vmatpush2.bf16.msra.mxu0 0
        %381 = vmatprep.subr.bf16.mxu0 0
        %382 = vmatpush2.bf16.msra.mxu0 0
        %383 = vmatprep.mubr.bf16.mxu0 0
        %384 = vmatmul.mubr.bf16.gmra.mxu0 %v349
        %v385 = vpop.f32.mrf.mxu0
        %v386 = vadd.f32 %v335, %v385
        %v387 = vpop.f32.mrf.mxu0
        %v388 = vpop.f32.mrf.mxu0
        %v389 = vadd.f32 %v335, %v388
        %v390 = vpop.f32.mrf.mxu0
        %391 = vdwg.mxu0
        %394 = vrot.lane.b32.xlu0 %v386, 120
        %v395 = vpop.permute.xlu0 %394
        %396 = vrot.lane.b32.xlu0 %v389, 120
        %v397 = vpop.permute.xlu0 %396
        %400 = vrot.lane.b32.xlu0 %v386, 112
        %v401 = vpop.permute.xlu0 %400
        %402 = vrot.lane.b32.xlu0 %v389, 112
        %v403 = vpop.permute.xlu0 %402
        %406 = vrot.lane.b32.xlu0 %v386, 104
        %v407 = vpop.permute.xlu0 %406
        %408 = vrot.lane.b32.xlu0 %v389, 104
        %v409 = vpop.permute.xlu0 %408
        %v412 = vpack.c.bf16 %v386, %v386
        %v413 = vpack.c.bf16 %v389, %v389
        %v414 = vpack.c.bf16 %v395, %v395
        %v415 = vpack.c.bf16 %v397, %v397
        %v416 = vpack.c.bf16 %v401, %v401
        %v417 = vpack.c.bf16 %v403, %v403
        %v418 = vpack.c.bf16 %v407, %v407
        %v419 = vpack.c.bf16 %v409, %v409
        %421 = vrot.lane.b32.xlu0 %v412, 96
        %v422 = vpop.permute.xlu0 %421
        %vm423 = vcmask 64512
        %v425 = vsel %vm423, %v412, 0
        %v428 = vsel %vm423, %v422, 0
        %430 = vmatprep.subr.bf16.mxu0 0
        %431 = vmatpush1.bf16.xpose.msra.mxu0 0
        %432 = vmatprep.subr.bf16.mxu0 0
        %433 = vmatpush1.bf16.xpose.msra.mxu0 0
        %434 = vmatprep.subr.bf16.mxu0 0
        %435 = vmatpush1.bf16.xpose.msra.mxu0 0
        %436 = vmatprep.subr.bf16.mxu0 0
        %437 = vmatpush1.bf16.xpose.msra.mxu0 0
        %438 = vmatprep.subr.bf16.mxu0 0
        %439 = vmatpush1.bf16.xpose.msra.mxu0 0
        %440 = vmatprep.subr.bf16.mxu0 0
        %441 = vmatpush1.bf16.xpose.msra.mxu0 0
        %442 = vmatprep.subr.bf16.mxu0 0
        %443 = vmatpush1.bf16.xpose.msra.mxu0 0
        %444 = vmatprep.subr.bf16.mxu0 0
        %445 = vmatpush1.bf16.xpose.msra.mxu0 %v428
        %446 = vmatprep.subr.bf16.mxu0 0
        %447 = vmatpush2.bf16.xpose.msra.mxu0 0
        %448 = vmatprep.subr.bf16.mxu0 0
        %449 = vmatpush2.bf16.xpose.msra.mxu0 0
        %450 = vmatprep.subr.bf16.mxu0 0
        %451 = vmatpush2.bf16.xpose.msra.mxu0 0
        %452 = vmatprep.subr.bf16.mxu0 0
        %453 = vmatpush2.bf16.xpose.msra.mxu0 0
        %454 = vmatprep.subr.bf16.mxu0 0
        %455 = vmatpush2.bf16.xpose.msra.mxu0 0
        %456 = vmatprep.subr.bf16.mxu0 0
        %457 = vmatpush2.bf16.xpose.msra.mxu0 0
        %458 = vmatprep.subr.bf16.mxu0 0
        %459 = vmatpush2.bf16.xpose.msra.mxu0 0
        %460 = vmatprep.subr.bf16.mxu0 0
        %461 = vmatpush2.bf16.xpose.msra.mxu0 0
        %462 = vmatprep.mubr.bf16.mxu0 0
        %463 = vmatmul.mubr.bf16.gmra.mxu0 %v425
        %v464 = vpop.f32.mrf.mxu0
        %v465 = vadd.f32 0.0, %v464
        %v466 = vpop.f32.mrf.mxu0
        %v467 = vpop.f32.mrf.mxu0
        %v468 = vpop.f32.mrf.mxu0
        %469 = vdwg.mxu0
        %471 = vrot.lane.b32.xlu0 %v413, 96
        %v472 = vpop.permute.xlu0 %471
        %v474 = vsel %vm423, %v413, 0
        %v477 = vsel %vm423, %v472, 0
        %479 = vmatprep.subr.bf16.mxu0 0
        %480 = vmatpush1.bf16.xpose.msra.mxu0 0
        %481 = vmatprep.subr.bf16.mxu0 0
        %482 = vmatpush1.bf16.xpose.msra.mxu0 0
        %483 = vmatprep.subr.bf16.mxu0 0
        %484 = vmatpush1.bf16.xpose.msra.mxu0 0
        %485 = vmatprep.subr.bf16.mxu0 0
        %486 = vmatpush1.bf16.xpose.msra.mxu0 0
        %487 = vmatprep.subr.bf16.mxu0 0
        %488 = vmatpush1.bf16.xpose.msra.mxu0 0
        %489 = vmatprep.subr.bf16.mxu0 0
        %490 = vmatpush1.bf16.xpose.msra.mxu0 0
        %491 = vmatprep.subr.bf16.mxu0 0
        %492 = vmatpush1.bf16.xpose.msra.mxu0 0
        %493 = vmatprep.subr.bf16.mxu0 0
        %494 = vmatpush1.bf16.xpose.msra.mxu0 %v477
        %495 = vmatprep.subr.bf16.mxu0 0
        %496 = vmatpush2.bf16.xpose.msra.mxu0 0
        %497 = vmatprep.subr.bf16.mxu0 0
        %498 = vmatpush2.bf16.xpose.msra.mxu0 0
        %499 = vmatprep.subr.bf16.mxu0 0
        %500 = vmatpush2.bf16.xpose.msra.mxu0 0
        %501 = vmatprep.subr.bf16.mxu0 0
        %502 = vmatpush2.bf16.xpose.msra.mxu0 0
        %503 = vmatprep.subr.bf16.mxu0 0
        %504 = vmatpush2.bf16.xpose.msra.mxu0 0
        %505 = vmatprep.subr.bf16.mxu0 0
        %506 = vmatpush2.bf16.xpose.msra.mxu0 0
        %507 = vmatprep.subr.bf16.mxu0 0
        %508 = vmatpush2.bf16.xpose.msra.mxu0 0
        %509 = vmatprep.subr.bf16.mxu0 0
        %510 = vmatpush2.bf16.xpose.msra.mxu0 0
        %511 = vmatprep.mubr.bf16.mxu0 0
        %512 = vmatmul.mubr.bf16.gmra.mxu0 %v474
        %v513 = vpop.f32.mrf.mxu0
        %v514 = vadd.f32 0.0, %v513
        %v515 = vpop.f32.mrf.mxu0
        %v516 = vpop.f32.mrf.mxu0
        %v517 = vpop.f32.mrf.mxu0
        %518 = vdwg.mxu0
        %520 = vrot.lane.b32.xlu0 %v414, 96
        %v521 = vpop.permute.xlu0 %520
        %v523 = vsel %vm423, %v414, 0
        %v526 = vsel %vm423, %v521, 0
        %528 = vmatprep.subr.bf16.mxu0 0
        %529 = vmatpush1.bf16.xpose.msra.mxu0 0
        %530 = vmatprep.subr.bf16.mxu0 0
        %531 = vmatpush1.bf16.xpose.msra.mxu0 0
        %532 = vmatprep.subr.bf16.mxu0 0
        %533 = vmatpush1.bf16.xpose.msra.mxu0 0
        %534 = vmatprep.subr.bf16.mxu0 0
        %535 = vmatpush1.bf16.xpose.msra.mxu0 0
        %536 = vmatprep.subr.bf16.mxu0 0
        %537 = vmatpush1.bf16.xpose.msra.mxu0 0
        %538 = vmatprep.subr.bf16.mxu0 0
        %539 = vmatpush1.bf16.xpose.msra.mxu0 0
        %540 = vmatprep.subr.bf16.mxu0 0
        %541 = vmatpush1.bf16.xpose.msra.mxu0 0
        %542 = vmatprep.subr.bf16.mxu0 0
        %543 = vmatpush1.bf16.xpose.msra.mxu0 %v526
        %544 = vmatprep.subr.bf16.mxu0 0
        %545 = vmatpush2.bf16.xpose.msra.mxu0 0
        %546 = vmatprep.subr.bf16.mxu0 0
        %547 = vmatpush2.bf16.xpose.msra.mxu0 0
        %548 = vmatprep.subr.bf16.mxu0 0
        %549 = vmatpush2.bf16.xpose.msra.mxu0 0
        %550 = vmatprep.subr.bf16.mxu0 0
        %551 = vmatpush2.bf16.xpose.msra.mxu0 0
        %552 = vmatprep.subr.bf16.mxu0 0
        %553 = vmatpush2.bf16.xpose.msra.mxu0 0
        %554 = vmatprep.subr.bf16.mxu0 0
        %555 = vmatpush2.bf16.xpose.msra.mxu0 0
        %556 = vmatprep.subr.bf16.mxu0 0
        %557 = vmatpush2.bf16.xpose.msra.mxu0 0
        %558 = vmatprep.subr.bf16.mxu0 0
        %559 = vmatpush2.bf16.xpose.msra.mxu0 0
        %560 = vmatprep.mubr.bf16.mxu0 0
        %561 = vmatmul.mubr.bf16.gmra.mxu0 %v523
        %v562 = vpop.f32.mrf.mxu0
        %v563 = vadd.f32 0.0, %v562
        %v564 = vpop.f32.mrf.mxu0
        %v565 = vpop.f32.mrf.mxu0
        %v566 = vpop.f32.mrf.mxu0
        %567 = vdwg.mxu0
        %569 = vrot.lane.b32.xlu0 %v415, 96
        %v570 = vpop.permute.xlu0 %569
        %v572 = vsel %vm423, %v415, 0
        %v575 = vsel %vm423, %v570, 0
        %577 = vmatprep.subr.bf16.mxu0 0
        %578 = vmatpush1.bf16.xpose.msra.mxu0 0
        %579 = vmatprep.subr.bf16.mxu0 0
        %580 = vmatpush1.bf16.xpose.msra.mxu0 0
        %581 = vmatprep.subr.bf16.mxu0 0
        %582 = vmatpush1.bf16.xpose.msra.mxu0 0
        %583 = vmatprep.subr.bf16.mxu0 0
        %584 = vmatpush1.bf16.xpose.msra.mxu0 0
        %585 = vmatprep.subr.bf16.mxu0 0
        %586 = vmatpush1.bf16.xpose.msra.mxu0 0
        %587 = vmatprep.subr.bf16.mxu0 0
        %588 = vmatpush1.bf16.xpose.msra.mxu0 0
        %589 = vmatprep.subr.bf16.mxu0 0
        %590 = vmatpush1.bf16.xpose.msra.mxu0 0
        %591 = vmatprep.subr.bf16.mxu0 0
        %592 = vmatpush1.bf16.xpose.msra.mxu0 %v575
        %593 = vmatprep.subr.bf16.mxu0 0
        %594 = vmatpush2.bf16.xpose.msra.mxu0 0
        %595 = vmatprep.subr.bf16.mxu0 0
        %596 = vmatpush2.bf16.xpose.msra.mxu0 0
        %597 = vmatprep.subr.bf16.mxu0 0
        %598 = vmatpush2.bf16.xpose.msra.mxu0 0
        %599 = vmatprep.subr.bf16.mxu0 0
        %600 = vmatpush2.bf16.xpose.msra.mxu0 0
        %601 = vmatprep.subr.bf16.mxu0 0
        %602 = vmatpush2.bf16.xpose.msra.mxu0 0
        %603 = vmatprep.subr.bf16.mxu0 0
        %604 = vmatpush2.bf16.xpose.msra.mxu0 0
        %605 = vmatprep.subr.bf16.mxu0 0
        %606 = vmatpush2.bf16.xpose.msra.mxu0 0
        %607 = vmatprep.subr.bf16.mxu0 0
        %608 = vmatpush2.bf16.xpose.msra.mxu0 0
        %609 = vmatprep.mubr.bf16.mxu0 0
        %610 = vmatmul.mubr.bf16.gmra.mxu0 %v572
        %v611 = vpop.f32.mrf.mxu0
        %v612 = vadd.f32 0.0, %v611
        %v613 = vpop.f32.mrf.mxu0
        %v614 = vpop.f32.mrf.mxu0
        %v615 = vpop.f32.mrf.mxu0
        %616 = vdwg.mxu0
        %618 = vrot.lane.b32.xlu0 %v416, 96
        %v619 = vpop.permute.xlu0 %618
        %v621 = vsel %vm423, %v416, 0
        %v624 = vsel %vm423, %v619, 0
        %626 = vmatprep.subr.bf16.mxu0 0
        %627 = vmatpush1.bf16.xpose.msra.mxu0 0
        %628 = vmatprep.subr.bf16.mxu0 0
        %629 = vmatpush1.bf16.xpose.msra.mxu0 0
        %630 = vmatprep.subr.bf16.mxu0 0
        %631 = vmatpush1.bf16.xpose.msra.mxu0 0
        %632 = vmatprep.subr.bf16.mxu0 0
        %633 = vmatpush1.bf16.xpose.msra.mxu0 0
        %634 = vmatprep.subr.bf16.mxu0 0
        %635 = vmatpush1.bf16.xpose.msra.mxu0 0
        %636 = vmatprep.subr.bf16.mxu0 0
        %637 = vmatpush1.bf16.xpose.msra.mxu0 0
        %638 = vmatprep.subr.bf16.mxu0 0
        %639 = vmatpush1.bf16.xpose.msra.mxu0 0
        %640 = vmatprep.subr.bf16.mxu0 0
        %641 = vmatpush1.bf16.xpose.msra.mxu0 %v624
        %642 = vmatprep.subr.bf16.mxu0 0
        %643 = vmatpush2.bf16.xpose.msra.mxu0 0
        %644 = vmatprep.subr.bf16.mxu0 0
        %645 = vmatpush2.bf16.xpose.msra.mxu0 0
        %646 = vmatprep.subr.bf16.mxu0 0
        %647 = vmatpush2.bf16.xpose.msra.mxu0 0
        %648 = vmatprep.subr.bf16.mxu0 0
        %649 = vmatpush2.bf16.xpose.msra.mxu0 0
        %650 = vmatprep.subr.bf16.mxu0 0
        %651 = vmatpush2.bf16.xpose.msra.mxu0 0
        %652 = vmatprep.subr.bf16.mxu0 0
        %653 = vmatpush2.bf16.xpose.msra.mxu0 0
        %654 = vmatprep.subr.bf16.mxu0 0
        %655 = vmatpush2.bf16.xpose.msra.mxu0 0
        %656 = vmatprep.subr.bf16.mxu0 0
        %657 = vmatpush2.bf16.xpose.msra.mxu0 0
        %658 = vmatprep.mubr.bf16.mxu0 0
        %659 = vmatmul.mubr.bf16.gmra.mxu0 %v621
        %v660 = vpop.f32.mrf.mxu0
        %v661 = vadd.f32 0.0, %v660
        %v662 = vpop.f32.mrf.mxu0
        %v663 = vpop.f32.mrf.mxu0
        %v664 = vpop.f32.mrf.mxu0
        %665 = vdwg.mxu0
        %667 = vrot.lane.b32.xlu0 %v417, 96
        %v668 = vpop.permute.xlu0 %667
        %v670 = vsel %vm423, %v417, 0
        %v673 = vsel %vm423, %v668, 0
        %675 = vmatprep.subr.bf16.mxu0 0
        %676 = vmatpush1.bf16.xpose.msra.mxu0 0
        %677 = vmatprep.subr.bf16.mxu0 0
        %678 = vmatpush1.bf16.xpose.msra.mxu0 0
        %679 = vmatprep.subr.bf16.mxu0 0
        %680 = vmatpush1.bf16.xpose.msra.mxu0 0
        %681 = vmatprep.subr.bf16.mxu0 0
        %682 = vmatpush1.bf16.xpose.msra.mxu0 0
        %683 = vmatprep.subr.bf16.mxu0 0
        %684 = vmatpush1.bf16.xpose.msra.mxu0 0
        %685 = vmatprep.subr.bf16.mxu0 0
        %686 = vmatpush1.bf16.xpose.msra.mxu0 0
        %687 = vmatprep.subr.bf16.mxu0 0
        %688 = vmatpush1.bf16.xpose.msra.mxu0 0
        %689 = vmatprep.subr.bf16.mxu0 0
        %690 = vmatpush1.bf16.xpose.msra.mxu0 %v673
        %691 = vmatprep.subr.bf16.mxu0 0
        %692 = vmatpush2.bf16.xpose.msra.mxu0 0
        %693 = vmatprep.subr.bf16.mxu0 0
        %694 = vmatpush2.bf16.xpose.msra.mxu0 0
        %695 = vmatprep.subr.bf16.mxu0 0
        %696 = vmatpush2.bf16.xpose.msra.mxu0 0
        %697 = vmatprep.subr.bf16.mxu0 0
        %698 = vmatpush2.bf16.xpose.msra.mxu0 0
        %699 = vmatprep.subr.bf16.mxu0 0
        %700 = vmatpush2.bf16.xpose.msra.mxu0 0
        %701 = vmatprep.subr.bf16.mxu0 0
        %702 = vmatpush2.bf16.xpose.msra.mxu0 0
        %703 = vmatprep.subr.bf16.mxu0 0
        %704 = vmatpush2.bf16.xpose.msra.mxu0 0
        %705 = vmatprep.subr.bf16.mxu0 0
        %706 = vmatpush2.bf16.xpose.msra.mxu0 0
        %707 = vmatprep.mubr.bf16.mxu0 0
        %708 = vmatmul.mubr.bf16.gmra.mxu0 %v670
        %v709 = vpop.f32.mrf.mxu0
        %v710 = vadd.f32 0.0, %v709
        %v711 = vpop.f32.mrf.mxu0
        %v712 = vpop.f32.mrf.mxu0
        %v713 = vpop.f32.mrf.mxu0
        %714 = vdwg.mxu0
        %716 = vrot.lane.b32.xlu0 %v418, 96
        %v717 = vpop.permute.xlu0 %716
        %v719 = vsel %vm423, %v418, 0
        %v722 = vsel %vm423, %v717, 0
        %724 = vmatprep.subr.bf16.mxu0 0
        %725 = vmatpush1.bf16.xpose.msra.mxu0 0
        %726 = vmatprep.subr.bf16.mxu0 0
        %727 = vmatpush1.bf16.xpose.msra.mxu0 0
        %728 = vmatprep.subr.bf16.mxu0 0
        %729 = vmatpush1.bf16.xpose.msra.mxu0 0
        %730 = vmatprep.subr.bf16.mxu0 0
        %731 = vmatpush1.bf16.xpose.msra.mxu0 0
        %732 = vmatprep.subr.bf16.mxu0 0
        %733 = vmatpush1.bf16.xpose.msra.mxu0 0
        %734 = vmatprep.subr.bf16.mxu0 0
        %735 = vmatpush1.bf16.xpose.msra.mxu0 0
        %736 = vmatprep.subr.bf16.mxu0 0
        %737 = vmatpush1.bf16.xpose.msra.mxu0 0
        %738 = vmatprep.subr.bf16.mxu0 0
        %739 = vmatpush1.bf16.xpose.msra.mxu0 %v722
        %740 = vmatprep.subr.bf16.mxu0 0
        %741 = vmatpush2.bf16.xpose.msra.mxu0 0
        %742 = vmatprep.subr.bf16.mxu0 0
        %743 = vmatpush2.bf16.xpose.msra.mxu0 0
        %744 = vmatprep.subr.bf16.mxu0 0
        %745 = vmatpush2.bf16.xpose.msra.mxu0 0
        %746 = vmatprep.subr.bf16.mxu0 0
        %747 = vmatpush2.bf16.xpose.msra.mxu0 0
        %748 = vmatprep.subr.bf16.mxu0 0
        %749 = vmatpush2.bf16.xpose.msra.mxu0 0
        %750 = vmatprep.subr.bf16.mxu0 0
        %751 = vmatpush2.bf16.xpose.msra.mxu0 0
        %752 = vmatprep.subr.bf16.mxu0 0
        %753 = vmatpush2.bf16.xpose.msra.mxu0 0
        %754 = vmatprep.subr.bf16.mxu0 0
        %755 = vmatpush2.bf16.xpose.msra.mxu0 0
        %756 = vmatprep.mubr.bf16.mxu0 0
        %757 = vmatmul.mubr.bf16.gmra.mxu0 %v719
        %v758 = vpop.f32.mrf.mxu0
        %v759 = vadd.f32 0.0, %v758
        %v760 = vpop.f32.mrf.mxu0
        %v761 = vpop.f32.mrf.mxu0
        %v762 = vpop.f32.mrf.mxu0
        %763 = vdwg.mxu0
        %765 = vrot.lane.b32.xlu0 %v419, 96
        %v766 = vpop.permute.xlu0 %765
        %v768 = vsel %vm423, %v419, 0
        %v771 = vsel %vm423, %v766, 0
        %773 = vmatprep.subr.bf16.mxu0 0
        %774 = vmatpush1.bf16.xpose.msra.mxu0 0
        %775 = vmatprep.subr.bf16.mxu0 0
        %776 = vmatpush1.bf16.xpose.msra.mxu0 0
        %777 = vmatprep.subr.bf16.mxu0 0
        %778 = vmatpush1.bf16.xpose.msra.mxu0 0
        %779 = vmatprep.subr.bf16.mxu0 0
        %780 = vmatpush1.bf16.xpose.msra.mxu0 0
        %781 = vmatprep.subr.bf16.mxu0 0
        %782 = vmatpush1.bf16.xpose.msra.mxu0 0
        %783 = vmatprep.subr.bf16.mxu0 0
        %784 = vmatpush1.bf16.xpose.msra.mxu0 0
        %785 = vmatprep.subr.bf16.mxu0 0
        %786 = vmatpush1.bf16.xpose.msra.mxu0 0
        %787 = vmatprep.subr.bf16.mxu0 0
        %788 = vmatpush1.bf16.xpose.msra.mxu0 %v771
        %789 = vmatprep.subr.bf16.mxu0 0
        %790 = vmatpush2.bf16.xpose.msra.mxu0 0
        %791 = vmatprep.subr.bf16.mxu0 0
        %792 = vmatpush2.bf16.xpose.msra.mxu0 0
        %793 = vmatprep.subr.bf16.mxu0 0
        %794 = vmatpush2.bf16.xpose.msra.mxu0 0
        %795 = vmatprep.subr.bf16.mxu0 0
        %796 = vmatpush2.bf16.xpose.msra.mxu0 0
        %797 = vmatprep.subr.bf16.mxu0 0
        %798 = vmatpush2.bf16.xpose.msra.mxu0 0
        %799 = vmatprep.subr.bf16.mxu0 0
        %800 = vmatpush2.bf16.xpose.msra.mxu0 0
        %801 = vmatprep.subr.bf16.mxu0 0
        %802 = vmatpush2.bf16.xpose.msra.mxu0 0
        %803 = vmatprep.subr.bf16.mxu0 0
        %804 = vmatpush2.bf16.xpose.msra.mxu0 0
        %805 = vmatprep.mubr.bf16.mxu0 0
        %806 = vmatmul.mubr.bf16.gmra.mxu0 %v768
        %v807 = vpop.f32.mrf.mxu0
        %v808 = vadd.f32 0.0, %v807
        %v809 = vpop.f32.mrf.mxu0
        %v810 = vpop.f32.mrf.mxu0
        %v811 = vpop.f32.mrf.mxu0
        %812 = vdwg.mxu0
        %v813 = vmul.f32 %v465, 0.35355338
        %v814 = vmul.f32 %v514, 0.35355338
        %v815 = vmul.f32 %v563, 0.35355338
        %v816 = vmul.f32 %v612, 0.35355338
        %v817 = vmul.f32 %v661, 0.35355338
        %v818 = vmul.f32 %v710, 0.35355338
        %v819 = vmul.f32 %v759, 0.35355338
        %v820 = vmul.f32 %v808, 0.35355338
        %v821 = vsel %vm423, %v813, -inf
        %822 = vmax.xlane.f32.xlu0 %v821
        %v823 = vpop.xlane.xlu0 %822
        %v824 = vsel %vm423, %v814, -inf
        %825 = vmax.xlane.f32.xlu0 %v824
        %v826 = vpop.xlane.xlu0 %825
        %v827 = vsel %vm423, %v815, -inf
        %828 = vmax.xlane.f32.xlu0 %v827
        %v829 = vpop.xlane.xlu0 %828
        %v830 = vsel %vm423, %v816, -inf
        %831 = vmax.xlane.f32.xlu0 %v830
        %v832 = vpop.xlane.xlu0 %831
        %v833 = vsel %vm423, %v817, -inf
        %834 = vmax.xlane.f32.xlu0 %v833
        %v835 = vpop.xlane.xlu0 %834
        %v836 = vsel %vm423, %v818, -inf
        %837 = vmax.xlane.f32.xlu0 %v836
        %v838 = vpop.xlane.xlu0 %837
        %v839 = vsel %vm423, %v819, -inf
        %840 = vmax.xlane.f32.xlu0 %v839
        %v841 = vpop.xlane.xlu0 %840
        %v842 = vsel %vm423, %v820, -inf
        %843 = vmax.xlane.f32.xlu0 %v842
        %v844 = vpop.xlane.xlu0 %843
        %v845 = vsub.f32 %v813, %v823
        %v846 = vsub.f32 %v814, %v826
        %v847 = vsub.f32 %v815, %v829
        %v848 = vsub.f32 %v816, %v832
        %v849 = vsub.f32 %v817, %v835
        %v850 = vsub.f32 %v818, %v838
        %v851 = vsub.f32 %v819, %v841
        %v852 = vsub.f32 %v820, %v844
        %v853 = vmul.f32 %v845, 1.442695
        %v854 = vpow.pop %v853
        %v855 = vmul.f32 %v846, 1.442695
        %v856 = vpow.pop %v855
        %v857 = vmul.f32 %v847, 1.442695
        %v858 = vpow.pop %v857
        %v859 = vmul.f32 %v848, 1.442695
        %v860 = vpow.pop %v859
        %v861 = vmul.f32 %v849, 1.442695
        %v862 = vpow.pop %v861
        %v863 = vmul.f32 %v850, 1.442695
        %v864 = vpow.pop %v863
        %v865 = vmul.f32 %v851, 1.442695
        %v866 = vpow.pop %v865
        %v867 = vmul.f32 %v852, 1.442695
        %v868 = vpow.pop %v867
        %v869 = vsel %vm423, %v854, 0.0
        %870 = vadd.xlane.f32.xlu0 %v869
        %v871 = vpop.xlane.xlu0 %870
        %v872 = vsel %vm423, %v856, 0.0
        %873 = vadd.xlane.f32.xlu0 %v872
        %v874 = vpop.xlane.xlu0 %873
        %v875 = vsel %vm423, %v858, 0.0
        %876 = vadd.xlane.f32.xlu0 %v875
        %v877 = vpop.xlane.xlu0 %876
        %v878 = vsel %vm423, %v860, 0.0
        %879 = vadd.xlane.f32.xlu0 %v878
        %v880 = vpop.xlane.xlu0 %879
        %v881 = vsel %vm423, %v862, 0.0
        %882 = vadd.xlane.f32.xlu0 %v881
        %v883 = vpop.xlane.xlu0 %882
        %v884 = vsel %vm423, %v864, 0.0
        %885 = vadd.xlane.f32.xlu0 %v884
        %v886 = vpop.xlane.xlu0 %885
        %v887 = vsel %vm423, %v866, 0.0
        %888 = vadd.xlane.f32.xlu0 %v887
        %v889 = vpop.xlane.xlu0 %888
        %v890 = vsel %vm423, %v868, 0.0
        %891 = vadd.xlane.f32.xlu0 %v890
        %v892 = vpop.xlane.xlu0 %891
        %v893 = vrcp.pop %v871
        %v894 = vrcp.pop %v874
        %v895 = vrcp.pop %v877
        %v896 = vrcp.pop %v880
        %v897 = vrcp.pop %v883
        %v898 = vrcp.pop %v886
        %v899 = vrcp.pop %v889
        %v900 = vrcp.pop %v892
        %v901 = vmul.f32 %v854, %v893
        %v902 = vmul.f32 %v856, %v894
        %v903 = vmul.f32 %v858, %v895
        %v904 = vmul.f32 %v860, %v896
        %v905 = vmul.f32 %v862, %v897
        %v906 = vmul.f32 %v864, %v898
        %v907 = vmul.f32 %v866, %v899
        %v908 = vmul.f32 %v868, %v900
        %v909 = vpack.c.bf16 %v901, %v901
        %v910 = vpack.c.bf16 %v902, %v902
        %v911 = vpack.c.bf16 %v903, %v903
        %v912 = vpack.c.bf16 %v904, %v904
        %v913 = vpack.c.bf16 %v905, %v905
        %v914 = vpack.c.bf16 %v906, %v906
        %v915 = vpack.c.bf16 %v907, %v907
        %v916 = vpack.c.bf16 %v908, %v908
        %917 = vrot.lane.b32.xlu0 %v412, 64
        %v918 = vpop.permute.xlu0 %917
        %v920 = vsel %vm423, %v909, 0
        %vm922 = vcmask 1043456
        %v924 = vsel %vm922, %v918, 0
        %926 = vmatprep.subr.bf16.mxu0 0
        %927 = vmatpush1.bf16.msra.mxu0 0
        %928 = vmatprep.subr.bf16.mxu0 0
        %929 = vmatpush1.bf16.msra.mxu0 0
        %930 = vmatprep.subr.bf16.mxu0 0
        %931 = vmatpush1.bf16.msra.mxu0 0
        %932 = vmatprep.subr.bf16.mxu0 0
        %933 = vmatpush1.bf16.msra.mxu0 0
        %934 = vmatprep.subr.bf16.mxu0 0
        %935 = vmatpush1.bf16.msra.mxu0 0
        %936 = vmatprep.subr.bf16.mxu0 0
        %937 = vmatpush1.bf16.msra.mxu0 0
        %938 = vmatprep.subr.bf16.mxu0 0
        %939 = vmatpush1.bf16.msra.mxu0 0
        %940 = vmatprep.subr.bf16.mxu0 0
        %941 = vmatpush1.bf16.msra.mxu0 %v924
        %942 = vmatprep.subr.bf16.mxu0 0
        %943 = vmatpush2.bf16.msra.mxu0 0
        %944 = vmatprep.subr.bf16.mxu0 0
        %945 = vmatpush2.bf16.msra.mxu0 0
        %946 = vmatprep.subr.bf16.mxu0 0
        %947 = vmatpush2.bf16.msra.mxu0 0
        %948 = vmatprep.subr.bf16.mxu0 0
        %949 = vmatpush2.bf16.msra.mxu0 0
        %950 = vmatprep.subr.bf16.mxu0 0
        %951 = vmatpush2.bf16.msra.mxu0 0
        %952 = vmatprep.subr.bf16.mxu0 0
        %953 = vmatpush2.bf16.msra.mxu0 0
        %954 = vmatprep.subr.bf16.mxu0 0
        %955 = vmatpush2.bf16.msra.mxu0 0
        %956 = vmatprep.subr.bf16.mxu0 0
        %957 = vmatpush2.bf16.msra.mxu0 0
        %958 = vmatprep.mubr.bf16.mxu0 0
        %959 = vmatmul.mubr.bf16.gmra.mxu0 %v920
        %v960 = vpop.f32.mrf.mxu0
        %v961 = vadd.f32 0.0, %v960
        %v962 = vpop.f32.mrf.mxu0
        %v963 = vpop.f32.mrf.mxu0
        %v964 = vpop.f32.mrf.mxu0
        %965 = vdwg.mxu0
        %966 = vrot.lane.b32.xlu0 %v413, 64
        %v967 = vpop.permute.xlu0 %966
        %v969 = vsel %vm423, %v910, 0
        %v972 = vsel %vm922, %v967, 0
        %974 = vmatprep.subr.bf16.mxu0 0
        %975 = vmatpush1.bf16.msra.mxu0 0
        %976 = vmatprep.subr.bf16.mxu0 0
        %977 = vmatpush1.bf16.msra.mxu0 0
        %978 = vmatprep.subr.bf16.mxu0 0
        %979 = vmatpush1.bf16.msra.mxu0 0
        %980 = vmatprep.subr.bf16.mxu0 0
        %981 = vmatpush1.bf16.msra.mxu0 0
        %982 = vmatprep.subr.bf16.mxu0 0
        %983 = vmatpush1.bf16.msra.mxu0 0
        %984 = vmatprep.subr.bf16.mxu0 0
        %985 = vmatpush1.bf16.msra.mxu0 0
        %986 = vmatprep.subr.bf16.mxu0 0
        %987 = vmatpush1.bf16.msra.mxu0 0
        %988 = vmatprep.subr.bf16.mxu0 0
        %989 = vmatpush1.bf16.msra.mxu0 %v972
        %990 = vmatprep.subr.bf16.mxu0 0
        %991 = vmatpush2.bf16.msra.mxu0 0
        %992 = vmatprep.subr.bf16.mxu0 0
        %993 = vmatpush2.bf16.msra.mxu0 0
        %994 = vmatprep.subr.bf16.mxu0 0
        %995 = vmatpush2.bf16.msra.mxu0 0
        %996 = vmatprep.subr.bf16.mxu0 0
        %997 = vmatpush2.bf16.msra.mxu0 0
        %998 = vmatprep.subr.bf16.mxu0 0
        %999 = vmatpush2.bf16.msra.mxu0 0
        %1000 = vmatprep.subr.bf16.mxu0 0
        %1001 = vmatpush2.bf16.msra.mxu0 0
        %1002 = vmatprep.subr.bf16.mxu0 0
        %1003 = vmatpush2.bf16.msra.mxu0 0
        %1004 = vmatprep.subr.bf16.mxu0 0
        %1005 = vmatpush2.bf16.msra.mxu0 0
        %1006 = vmatprep.mubr.bf16.mxu0 0
        %1007 = vmatmul.mubr.bf16.gmra.mxu0 %v969
        %v1008 = vpop.f32.mrf.mxu0
        %v1009 = vadd.f32 0.0, %v1008
        %v1010 = vpop.f32.mrf.mxu0
        %v1011 = vpop.f32.mrf.mxu0
        %v1012 = vpop.f32.mrf.mxu0
        %1013 = vdwg.mxu0
        %1014 = vrot.lane.b32.xlu0 %v414, 64
        %v1015 = vpop.permute.xlu0 %1014
        %v1017 = vsel %vm423, %v911, 0
        %v1020 = vsel %vm922, %v1015, 0
        %1022 = vmatprep.subr.bf16.mxu0 0
        %1023 = vmatpush1.bf16.msra.mxu0 0
        %1024 = vmatprep.subr.bf16.mxu0 0
        %1025 = vmatpush1.bf16.msra.mxu0 0
        %1026 = vmatprep.subr.bf16.mxu0 0
        %1027 = vmatpush1.bf16.msra.mxu0 0
        %1028 = vmatprep.subr.bf16.mxu0 0
        %1029 = vmatpush1.bf16.msra.mxu0 0
        %1030 = vmatprep.subr.bf16.mxu0 0
        %1031 = vmatpush1.bf16.msra.mxu0 0
        %1032 = vmatprep.subr.bf16.mxu0 0
        %1033 = vmatpush1.bf16.msra.mxu0 0
        %1034 = vmatprep.subr.bf16.mxu0 0
        %1035 = vmatpush1.bf16.msra.mxu0 0
        %1036 = vmatprep.subr.bf16.mxu0 0
        %1037 = vmatpush1.bf16.msra.mxu0 %v1020
        %1038 = vmatprep.subr.bf16.mxu0 0
        %1039 = vmatpush2.bf16.msra.mxu0 0
        %1040 = vmatprep.subr.bf16.mxu0 0
        %1041 = vmatpush2.bf16.msra.mxu0 0
        %1042 = vmatprep.subr.bf16.mxu0 0
        %1043 = vmatpush2.bf16.msra.mxu0 0
        %1044 = vmatprep.subr.bf16.mxu0 0
        %1045 = vmatpush2.bf16.msra.mxu0 0
        %1046 = vmatprep.subr.bf16.mxu0 0
        %1047 = vmatpush2.bf16.msra.mxu0 0
        %1048 = vmatprep.subr.bf16.mxu0 0
        %1049 = vmatpush2.bf16.msra.mxu0 0
        %1050 = vmatprep.subr.bf16.mxu0 0
        %1051 = vmatpush2.bf16.msra.mxu0 0
        %1052 = vmatprep.subr.bf16.mxu0 0
        %1053 = vmatpush2.bf16.msra.mxu0 0
        %1054 = vmatprep.mubr.bf16.mxu0 0
        %1055 = vmatmul.mubr.bf16.gmra.mxu0 %v1017
        %v1056 = vpop.f32.mrf.mxu0
        %v1057 = vadd.f32 0.0, %v1056
        %v1058 = vpop.f32.mrf.mxu0
        %v1059 = vpop.f32.mrf.mxu0
        %v1060 = vpop.f32.mrf.mxu0
        %1061 = vdwg.mxu0
        %1062 = vrot.lane.b32.xlu0 %v415, 64
        %v1063 = vpop.permute.xlu0 %1062
        %v1065 = vsel %vm423, %v912, 0
        %v1068 = vsel %vm922, %v1063, 0
        %1070 = vmatprep.subr.bf16.mxu0 0
        %1071 = vmatpush1.bf16.msra.mxu0 0
        %1072 = vmatprep.subr.bf16.mxu0 0
        %1073 = vmatpush1.bf16.msra.mxu0 0
        %1074 = vmatprep.subr.bf16.mxu0 0
        %1075 = vmatpush1.bf16.msra.mxu0 0
        %1076 = vmatprep.subr.bf16.mxu0 0
        %1077 = vmatpush1.bf16.msra.mxu0 0
        %1078 = vmatprep.subr.bf16.mxu0 0
        %1079 = vmatpush1.bf16.msra.mxu0 0
        %1080 = vmatprep.subr.bf16.mxu0 0
        %1081 = vmatpush1.bf16.msra.mxu0 0
        %1082 = vmatprep.subr.bf16.mxu0 0
        %1083 = vmatpush1.bf16.msra.mxu0 0
        %1084 = vmatprep.subr.bf16.mxu0 0
        %1085 = vmatpush1.bf16.msra.mxu0 %v1068
        %1086 = vmatprep.subr.bf16.mxu0 0
        %1087 = vmatpush2.bf16.msra.mxu0 0
        %1088 = vmatprep.subr.bf16.mxu0 0
        %1089 = vmatpush2.bf16.msra.mxu0 0
        %1090 = vmatprep.subr.bf16.mxu0 0
        %1091 = vmatpush2.bf16.msra.mxu0 0
        %1092 = vmatprep.subr.bf16.mxu0 0
        %1093 = vmatpush2.bf16.msra.mxu0 0
        %1094 = vmatprep.subr.bf16.mxu0 0
        %1095 = vmatpush2.bf16.msra.mxu0 0
        %1096 = vmatprep.subr.bf16.mxu0 0
        %1097 = vmatpush2.bf16.msra.mxu0 0
        %1098 = vmatprep.subr.bf16.mxu0 0
        %1099 = vmatpush2.bf16.msra.mxu0 0
        %1100 = vmatprep.subr.bf16.mxu0 0
        %1101 = vmatpush2.bf16.msra.mxu0 0
        %1102 = vmatprep.mubr.bf16.mxu0 0
        %1103 = vmatmul.mubr.bf16.gmra.mxu0 %v1065
        %v1104 = vpop.f32.mrf.mxu0
        %v1105 = vadd.f32 0.0, %v1104
        %v1106 = vpop.f32.mrf.mxu0
        %v1107 = vpop.f32.mrf.mxu0
        %v1108 = vpop.f32.mrf.mxu0
        %1109 = vdwg.mxu0
        %1110 = vrot.lane.b32.xlu0 %v416, 64
        %v1111 = vpop.permute.xlu0 %1110
        %v1113 = vsel %vm423, %v913, 0
        %v1116 = vsel %vm922, %v1111, 0
        %1118 = vmatprep.subr.bf16.mxu0 0
        %1119 = vmatpush1.bf16.msra.mxu0 0
        %1120 = vmatprep.subr.bf16.mxu0 0
        %1121 = vmatpush1.bf16.msra.mxu0 0
        %1122 = vmatprep.subr.bf16.mxu0 0
        %1123 = vmatpush1.bf16.msra.mxu0 0
        %1124 = vmatprep.subr.bf16.mxu0 0
        %1125 = vmatpush1.bf16.msra.mxu0 0
        %1126 = vmatprep.subr.bf16.mxu0 0
        %1127 = vmatpush1.bf16.msra.mxu0 0
        %1128 = vmatprep.subr.bf16.mxu0 0
        %1129 = vmatpush1.bf16.msra.mxu0 0
        %1130 = vmatprep.subr.bf16.mxu0 0
        %1131 = vmatpush1.bf16.msra.mxu0 0
        %1132 = vmatprep.subr.bf16.mxu0 0
        %1133 = vmatpush1.bf16.msra.mxu0 %v1116
        %1134 = vmatprep.subr.bf16.mxu0 0
        %1135 = vmatpush2.bf16.msra.mxu0 0
        %1136 = vmatprep.subr.bf16.mxu0 0
        %1137 = vmatpush2.bf16.msra.mxu0 0
        %1138 = vmatprep.subr.bf16.mxu0 0
        %1139 = vmatpush2.bf16.msra.mxu0 0
        %1140 = vmatprep.subr.bf16.mxu0 0
        %1141 = vmatpush2.bf16.msra.mxu0 0
        %1142 = vmatprep.subr.bf16.mxu0 0
        %1143 = vmatpush2.bf16.msra.mxu0 0
        %1144 = vmatprep.subr.bf16.mxu0 0
        %1145 = vmatpush2.bf16.msra.mxu0 0
        %1146 = vmatprep.subr.bf16.mxu0 0
        %1147 = vmatpush2.bf16.msra.mxu0 0
        %1148 = vmatprep.subr.bf16.mxu0 0
        %1149 = vmatpush2.bf16.msra.mxu0 0
        %1150 = vmatprep.mubr.bf16.mxu0 0
        %1151 = vmatmul.mubr.bf16.gmra.mxu0 %v1113
        %v1152 = vpop.f32.mrf.mxu0
        %v1153 = vadd.f32 0.0, %v1152
        %v1154 = vpop.f32.mrf.mxu0
        %v1155 = vpop.f32.mrf.mxu0
        %v1156 = vpop.f32.mrf.mxu0
        %1157 = vdwg.mxu0
        %1158 = vrot.lane.b32.xlu0 %v417, 64
        %v1159 = vpop.permute.xlu0 %1158
        %v1161 = vsel %vm423, %v914, 0
        %v1164 = vsel %vm922, %v1159, 0
        %1166 = vmatprep.subr.bf16.mxu0 0
        %1167 = vmatpush1.bf16.msra.mxu0 0
        %1168 = vmatprep.subr.bf16.mxu0 0
        %1169 = vmatpush1.bf16.msra.mxu0 0
        %1170 = vmatprep.subr.bf16.mxu0 0
        %1171 = vmatpush1.bf16.msra.mxu0 0
        %1172 = vmatprep.subr.bf16.mxu0 0
        %1173 = vmatpush1.bf16.msra.mxu0 0
        %1174 = vmatprep.subr.bf16.mxu0 0
        %1175 = vmatpush1.bf16.msra.mxu0 0
        %1176 = vmatprep.subr.bf16.mxu0 0
        %1177 = vmatpush1.bf16.msra.mxu0 0
        %1178 = vmatprep.subr.bf16.mxu0 0
        %1179 = vmatpush1.bf16.msra.mxu0 0
        %1180 = vmatprep.subr.bf16.mxu0 0
        %1181 = vmatpush1.bf16.msra.mxu0 %v1164
        %1182 = vmatprep.subr.bf16.mxu0 0
        %1183 = vmatpush2.bf16.msra.mxu0 0
        %1184 = vmatprep.subr.bf16.mxu0 0
        %1185 = vmatpush2.bf16.msra.mxu0 0
        %1186 = vmatprep.subr.bf16.mxu0 0
        %1187 = vmatpush2.bf16.msra.mxu0 0
        %1188 = vmatprep.subr.bf16.mxu0 0
        %1189 = vmatpush2.bf16.msra.mxu0 0
        %1190 = vmatprep.subr.bf16.mxu0 0
        %1191 = vmatpush2.bf16.msra.mxu0 0
        %1192 = vmatprep.subr.bf16.mxu0 0
        %1193 = vmatpush2.bf16.msra.mxu0 0
        %1194 = vmatprep.subr.bf16.mxu0 0
        %1195 = vmatpush2.bf16.msra.mxu0 0
        %1196 = vmatprep.subr.bf16.mxu0 0
        %1197 = vmatpush2.bf16.msra.mxu0 0
        %1198 = vmatprep.mubr.bf16.mxu0 0
        %1199 = vmatmul.mubr.bf16.gmra.mxu0 %v1161
        %v1200 = vpop.f32.mrf.mxu0
        %v1201 = vadd.f32 0.0, %v1200
        %v1202 = vpop.f32.mrf.mxu0
        %v1203 = vpop.f32.mrf.mxu0
        %v1204 = vpop.f32.mrf.mxu0
        %1205 = vdwg.mxu0
        %1206 = vrot.lane.b32.xlu0 %v418, 64
        %v1207 = vpop.permute.xlu0 %1206
        %v1209 = vsel %vm423, %v915, 0
        %v1212 = vsel %vm922, %v1207, 0
        %1214 = vmatprep.subr.bf16.mxu0 0
        %1215 = vmatpush1.bf16.msra.mxu0 0
        %1216 = vmatprep.subr.bf16.mxu0 0
        %1217 = vmatpush1.bf16.msra.mxu0 0
        %1218 = vmatprep.subr.bf16.mxu0 0
        %1219 = vmatpush1.bf16.msra.mxu0 0
        %1220 = vmatprep.subr.bf16.mxu0 0
        %1221 = vmatpush1.bf16.msra.mxu0 0
        %1222 = vmatprep.subr.bf16.mxu0 0
        %1223 = vmatpush1.bf16.msra.mxu0 0
        %1224 = vmatprep.subr.bf16.mxu0 0
        %1225 = vmatpush1.bf16.msra.mxu0 0
        %1226 = vmatprep.subr.bf16.mxu0 0
        %1227 = vmatpush1.bf16.msra.mxu0 0
        %1228 = vmatprep.subr.bf16.mxu0 0
        %1229 = vmatpush1.bf16.msra.mxu0 %v1212
        %1230 = vmatprep.subr.bf16.mxu0 0
        %1231 = vmatpush2.bf16.msra.mxu0 0
        %1232 = vmatprep.subr.bf16.mxu0 0
        %1233 = vmatpush2.bf16.msra.mxu0 0
        %1234 = vmatprep.subr.bf16.mxu0 0
        %1235 = vmatpush2.bf16.msra.mxu0 0
        %1236 = vmatprep.subr.bf16.mxu0 0
        %1237 = vmatpush2.bf16.msra.mxu0 0
        %1238 = vmatprep.subr.bf16.mxu0 0
        %1239 = vmatpush2.bf16.msra.mxu0 0
        %1240 = vmatprep.subr.bf16.mxu0 0
        %1241 = vmatpush2.bf16.msra.mxu0 0
        %1242 = vmatprep.subr.bf16.mxu0 0
        %1243 = vmatpush2.bf16.msra.mxu0 0
        %1244 = vmatprep.subr.bf16.mxu0 0
        %1245 = vmatpush2.bf16.msra.mxu0 0
        %1246 = vmatprep.mubr.bf16.mxu0 0
        %1247 = vmatmul.mubr.bf16.gmra.mxu0 %v1209
        %v1248 = vpop.f32.mrf.mxu0
        %v1249 = vadd.f32 0.0, %v1248
        %v1250 = vpop.f32.mrf.mxu0
        %v1251 = vpop.f32.mrf.mxu0
        %v1252 = vpop.f32.mrf.mxu0
        %1253 = vdwg.mxu0
        %1254 = vrot.lane.b32.xlu0 %v419, 64
        %v1255 = vpop.permute.xlu0 %1254
        %v1257 = vsel %vm423, %v916, 0
        %v1260 = vsel %vm922, %v1255, 0
        %1262 = vmatprep.subr.bf16.mxu0 0
        %1263 = vmatpush1.bf16.msra.mxu0 0
        %1264 = vmatprep.subr.bf16.mxu0 0
        %1265 = vmatpush1.bf16.msra.mxu0 0
        %1266 = vmatprep.subr.bf16.mxu0 0
        %1267 = vmatpush1.bf16.msra.mxu0 0
        %1268 = vmatprep.subr.bf16.mxu0 0
        %1269 = vmatpush1.bf16.msra.mxu0 0
        %1270 = vmatprep.subr.bf16.mxu0 0
        %1271 = vmatpush1.bf16.msra.mxu0 0
        %1272 = vmatprep.subr.bf16.mxu0 0
        %1273 = vmatpush1.bf16.msra.mxu0 0
        %1274 = vmatprep.subr.bf16.mxu0 0
        %1275 = vmatpush1.bf16.msra.mxu0 0
        %1276 = vmatprep.subr.bf16.mxu0 0
        %1277 = vmatpush1.bf16.msra.mxu0 %v1260
        %1278 = vmatprep.subr.bf16.mxu0 0
        %1279 = vmatpush2.bf16.msra.mxu0 0
        %1280 = vmatprep.subr.bf16.mxu0 0
        %1281 = vmatpush2.bf16.msra.mxu0 0
        %1282 = vmatprep.subr.bf16.mxu0 0
        %1283 = vmatpush2.bf16.msra.mxu0 0
        %1284 = vmatprep.subr.bf16.mxu0 0
        %1285 = vmatpush2.bf16.msra.mxu0 0
        %1286 = vmatprep.subr.bf16.mxu0 0
        %1287 = vmatpush2.bf16.msra.mxu0 0
        %1288 = vmatprep.subr.bf16.mxu0 0
        %1289 = vmatpush2.bf16.msra.mxu0 0
        %1290 = vmatprep.subr.bf16.mxu0 0
        %1291 = vmatpush2.bf16.msra.mxu0 0
        %1292 = vmatprep.subr.bf16.mxu0 0
        %1293 = vmatpush2.bf16.msra.mxu0 0
        %1294 = vmatprep.mubr.bf16.mxu0 0
        %1295 = vmatmul.mubr.bf16.gmra.mxu0 %v1257
        %v1296 = vpop.f32.mrf.mxu0
        %v1297 = vadd.f32 0.0, %v1296
        %v1298 = vpop.f32.mrf.mxu0
        %v1299 = vpop.f32.mrf.mxu0
        %v1300 = vpop.f32.mrf.mxu0
        %1301 = vdwg.mxu0
        %1304 = vrot.lane.b32.xlu0 %v1057, 8
        %v1305 = vpop.permute.xlu0 %1304
        %1306 = vrot.lane.b32.xlu0 %v1105, 8
        %v1307 = vpop.permute.xlu0 %1306
        %1312 = vrot.lane.b32.xlu0 %v1153, 16
        %v1313 = vpop.permute.xlu0 %1312
        %1314 = vrot.lane.b32.xlu0 %v1201, 16
        %v1315 = vpop.permute.xlu0 %1314
        %1320 = vrot.lane.b32.xlu0 %v1249, 24
        %v1321 = vpop.permute.xlu0 %1320
        %1322 = vrot.lane.b32.xlu0 %v1297, 24
        %v1323 = vpop.permute.xlu0 %1322
        %v1326 = vsel %vm423, %v961, %v1305
        %v1327 = vsel %vm423, %v1009, %v1307
        %vm1328 = vcmask 130048
        %v1329 = vsel %vm1328, %v1326, %v1313
        %v1330 = vsel %vm1328, %v1327, %v1315
        %vm1331 = vcmask 195584
        %v1332 = vsel %vm1331, %v1329, %v1321
        %v1333 = vsel %vm1331, %v1330, %v1323
        %v1334 = vpack.c.bf16 %v1333, %v1332
        %v1335 = vlaneseq
        %v1336 = vshrl.u32 %v1335, 7
        %v1337 = vsub.s32 3, %v1336
        %v1338 = vrot.slane %v288, %v1337
        %1339 = vrot.lane.b32.xlu0 %v344, 32
        %v1340 = vpop.permute.xlu0 %1339
        %1341 = vrot.lane.b32.xlu0 %v345, 32
        %v1342 = vpop.permute.xlu0 %1341
        %v1346 = vsel %vm291, %v1334, 0
        %1348 = vmatprep.subr.bf16.mxu0 0
        %1349 = vmatpush1.bf16.msra.mxu0 0
        %1350 = vmatprep.subr.bf16.mxu0 0
        %1351 = vmatpush1.bf16.msra.mxu0 0
        %1352 = vmatprep.subr.bf16.mxu0 0
        %1353 = vmatpush1.bf16.msra.mxu0 0
        %1354 = vmatprep.subr.bf16.mxu0 0
        %1355 = vmatpush1.bf16.msra.mxu0 0
        %1356 = vmatprep.subr.bf16.mxu0 0
        %1357 = vmatpush1.bf16.msra.mxu0 0
        %1358 = vmatprep.subr.bf16.mxu0 0
        %1359 = vmatpush1.bf16.msra.mxu0 0
        %1360 = vmatprep.subr.bf16.mxu0 0
        %1361 = vmatpush1.bf16.msra.mxu0 %v1342
        %1362 = vmatprep.subr.bf16.mxu0 0
        %1363 = vmatpush1.bf16.msra.mxu0 %v1340
        %1364 = vmatprep.subr.bf16.mxu0 0
        %1365 = vmatpush2.bf16.msra.mxu0 0
        %1366 = vmatprep.subr.bf16.mxu0 0
        %1367 = vmatpush2.bf16.msra.mxu0 0
        %1368 = vmatprep.subr.bf16.mxu0 0
        %1369 = vmatpush2.bf16.msra.mxu0 0
        %1370 = vmatprep.subr.bf16.mxu0 0
        %1371 = vmatpush2.bf16.msra.mxu0 0
        %1372 = vmatprep.subr.bf16.mxu0 0
        %1373 = vmatpush2.bf16.msra.mxu0 0
        %1374 = vmatprep.subr.bf16.mxu0 0
        %1375 = vmatpush2.bf16.msra.mxu0 0
        %1376 = vmatprep.subr.bf16.mxu0 0
        %1377 = vmatpush2.bf16.msra.mxu0 0
        %1378 = vmatprep.subr.bf16.mxu0 0
        %1379 = vmatpush2.bf16.msra.mxu0 0
        %1380 = vmatprep.mubr.bf16.mxu0 0
        %1381 = vmatmul.mubr.bf16.gmra.mxu0 %v1346
        %v1382 = vpop.f32.mrf.mxu0
        %v1383 = vadd.f32 %v1338, %v1382
        %v1384 = vpop.f32.mrf.mxu0
        %v1385 = vpop.f32.mrf.mxu0
        %v1386 = vadd.f32 %v1338, %v1385
        %v1387 = vpop.f32.mrf.mxu0
        %1388 = vdwg.mxu0
        %v1389 = vadd.f32 %v289, %v1383
        %v1390 = vadd.f32 %v290, %v1386
        %v1391 = vsel %vm291, %v1389, 0.0
        %1392 = vadd.xlane.f32.xlu0 %v1391
        %v1393 = vpop.xlane.xlu0 %1392
        %v1394 = vsel %vm291, %v1390, 0.0
        %1395 = vadd.xlane.f32.xlu0 %v1394
        %v1396 = vpop.xlane.xlu0 %1395
        %v1397 = vmul.f32 %v1393, %v298
        %v1398 = vmul.f32 %v1396, %v298
        %v1399 = vsub.f32 %v1389, %v1397
        %v1400 = vsub.f32 %v1390, %v1398
        %v1401 = vmul.f32 %v1399, %v1399
        %v1402 = vmul.f32 %v1400, %v1400
        %v1403 = vsel %vm291, %v1401, 0.0
        %1404 = vadd.xlane.f32.xlu0 %v1403
        %v1405 = vpop.xlane.xlu0 %1404
        %v1406 = vsel %vm291, %v1402, 0.0
        %1407 = vadd.xlane.f32.xlu0 %v1406
        %v1408 = vpop.xlane.xlu0 %1407
        %v1409 = vmul.f32 %v1405, %v298
        %v1410 = vmul.f32 %v1408, %v298
        %v1411 = vadd.f32 %v1409, 1e-05
        %v1412 = vadd.f32 %v1410, 1e-05
        %v1413 = vrsqrt.pop %v1411
        %v1414 = vrsqrt.pop %v1412
        %v1415 = vmul.f32 %v1399, %v1413
        %v1416 = vmul.f32 %v1400, %v1414
        %v1417 = vlaneseq
        %v1418 = vshrl.u32 %v1417, 7
        %v1419 = vsub.s32 4, %v1418
        %v1420 = vrot.slane %v288, %v1419
        %v1421 = vmul.f32 %v1415, %v1420
        %v1422 = vmul.f32 %v1416, %v1420
        %v1423 = vlaneseq
        %v1424 = vshrl.u32 %v1423, 7
        %v1425 = vsub.s32 5, %v1424
        %v1426 = vrot.slane %v288, %v1425
        %v1427 = vadd.f32 %v1421, %v1426
        %v1428 = vadd.f32 %v1422, %v1426
        %v1429 = vpack.c.bf16 %v1428, %v1427
        %v1430 = vlaneseq
        %v1431 = vshrl.u32 %v1430, 7
        %v1432 = vsub.s32 6, %v1431
        %v1433 = vrot.slane %v288, %v1432
        %v1434 = vunpack.c.h.b16 %v268
        %v1435 = vunpack.c.h.b16 %v269
        %v1436 = vunpack.c.h.b16 %v270
        %v1437 = vunpack.c.h.b16 %v271
        %v1438 = vpack.c.b16 %v1435, %v1434
        %v1439 = vpack.c.b16 %v1437, %v1436
        %v1443 = vsel %vm291, %v1429, 0
        %1445 = vmatprep.subr.bf16.mxu0 0
        %1446 = vmatpush1.bf16.msra.mxu0 0
        %1447 = vmatprep.subr.bf16.mxu0 0
        %1448 = vmatpush1.bf16.msra.mxu0 0
        %1449 = vmatprep.subr.bf16.mxu0 0
        %1450 = vmatpush1.bf16.msra.mxu0 0
        %1451 = vmatprep.subr.bf16.mxu0 0
        %1452 = vmatpush1.bf16.msra.mxu0 0
        %1453 = vmatprep.subr.bf16.mxu0 0
        %1454 = vmatpush1.bf16.msra.mxu0 0
        %1455 = vmatprep.subr.bf16.mxu0 0
        %1456 = vmatpush1.bf16.msra.mxu0 0
        %1457 = vmatprep.subr.bf16.mxu0 0
        %1458 = vmatpush1.bf16.msra.mxu0 %v1439
        %1459 = vmatprep.subr.bf16.mxu0 0
        %1460 = vmatpush1.bf16.msra.mxu0 %v1438
        %1461 = vmatprep.subr.bf16.mxu0 0
        %1462 = vmatpush2.bf16.msra.mxu0 0
        %1463 = vmatprep.subr.bf16.mxu0 0
        %1464 = vmatpush2.bf16.msra.mxu0 0
        %1465 = vmatprep.subr.bf16.mxu0 0
        %1466 = vmatpush2.bf16.msra.mxu0 0
        %1467 = vmatprep.subr.bf16.mxu0 0
        %1468 = vmatpush2.bf16.msra.mxu0 0
        %1469 = vmatprep.subr.bf16.mxu0 0
        %1470 = vmatpush2.bf16.msra.mxu0 0
        %1471 = vmatprep.subr.bf16.mxu0 0
        %1472 = vmatpush2.bf16.msra.mxu0 0
        %1473 = vmatprep.subr.bf16.mxu0 0
        %1474 = vmatpush2.bf16.msra.mxu0 0
        %1475 = vmatprep.subr.bf16.mxu0 0
        %1476 = vmatpush2.bf16.msra.mxu0 0
        %1477 = vmatprep.mubr.bf16.mxu0 0
        %1478 = vmatmul.mubr.bf16.gmra.mxu0 %v1443
        %v1479 = vpop.f32.mrf.mxu0
        %v1480 = vadd.f32 %v1433, %v1479
        %v1481 = vpop.f32.mrf.mxu0
        %v1482 = vpop.f32.mrf.mxu0
        %v1483 = vadd.f32 %v1433, %v1482
        %v1484 = vpop.f32.mrf.mxu0
        %1485 = vdwg.mxu0
        %v1486 = vmul.f32 %v1480, %v1480
        %v1487 = vmul.f32 %v1483, %v1483
        %v1488 = vmul.f32 %v1480, %v1486
        %v1489 = vmul.f32 %v1483, %v1487
        %v1490 = vmul.f32 %v1488, 0.044715
        %v1491 = vmul.f32 %v1489, 0.044715
        %v1492 = vadd.f32 %v1480, %v1490
        %v1493 = vadd.f32 %v1483, %v1491
        %v1494 = vmul.f32 %v1492, 0.7978846
        %v1495 = vmul.f32 %v1493, 0.7978846
        %v1496 = vtanh.pop %v1494
        %v1497 = vtanh.pop %v1495
        %v1498 = vadd.f32 %v1496, 1.0
        %v1499 = vadd.f32 %v1497, 1.0
        %v1500 = vmul.f32 %v1498, 0.5
        %v1501 = vmul.f32 %v1499, 0.5
        %v1502 = vmul.f32 %v1480, %v1500
        %v1503 = vmul.f32 %v1483, %v1501
        %v1504 = vpack.c.bf16 %v1503, %v1502
        %v1505 = vlaneseq
        %v1506 = vshrl.u32 %v1505, 7
        %v1507 = vsub.s32 7, %v1506
        %v1508 = vrot.slane %v288, %v1507
        %v1525 = vunpack.c.l.b16 %v272
        %v1526 = vunpack.c.l.b16 %v273
        %v1527 = vunpack.c.l.b16 %v274
        %v1528 = vunpack.c.l.b16 %v275
        %v1529 = vunpack.c.l.b16 %v276
        %v1530 = vunpack.c.l.b16 %v277
        %v1531 = vunpack.c.l.b16 %v278
        %v1532 = vunpack.c.l.b16 %v279
        %v1533 = vunpack.c.l.b16 %v280
        %v1534 = vunpack.c.l.b16 %v281
        %v1535 = vunpack.c.l.b16 %v282
        %v1536 = vunpack.c.l.b16 %v283
        %v1537 = vunpack.c.l.b16 %v284
        %v1538 = vunpack.c.l.b16 %v285
        %v1539 = vunpack.c.l.b16 %v286
        %v1540 = vunpack.c.l.b16 %v287
        %v1541 = vpack.c.b16 %v1526, %v1525
        %v1542 = vpack.c.b16 %v1528, %v1527
        %v1543 = vpack.c.b16 %v1530, %v1529
        %v1544 = vpack.c.b16 %v1532, %v1531
        %v1545 = vpack.c.b16 %v1534, %v1533
        %v1546 = vpack.c.b16 %v1536, %v1535
        %v1547 = vpack.c.b16 %v1538, %v1537
        %v1548 = vpack.c.b16 %v1540, %v1539
        %1557 = vmatprep.subr.bf16.mxu0 0
        %1558 = vmatpush1.bf16.msra.mxu0 %v1548
        %1559 = vmatprep.subr.bf16.mxu0 0
        %1560 = vmatpush1.bf16.msra.mxu0 %v1547
        %1561 = vmatprep.subr.bf16.mxu0 0
        %1562 = vmatpush1.bf16.msra.mxu0 %v1546
        %1563 = vmatprep.subr.bf16.mxu0 0
        %1564 = vmatpush1.bf16.msra.mxu0 %v1545
        %1565 = vmatprep.subr.bf16.mxu0 0
        %1566 = vmatpush1.bf16.msra.mxu0 %v1544
        %1567 = vmatprep.subr.bf16.mxu0 0
        %1568 = vmatpush1.bf16.msra.mxu0 %v1543
        %1569 = vmatprep.subr.bf16.mxu0 0
        %1570 = vmatpush1.bf16.msra.mxu0 %v1542
        %1571 = vmatprep.subr.bf16.mxu0 0
        %1572 = vmatpush1.bf16.msra.mxu0 %v1541
        %1573 = vmatprep.subr.bf16.mxu0 0
        %1574 = vmatpush2.bf16.msra.mxu0 0
        %1575 = vmatprep.subr.bf16.mxu0 0
        %1576 = vmatpush2.bf16.msra.mxu0 0
        %1577 = vmatprep.subr.bf16.mxu0 0
        %1578 = vmatpush2.bf16.msra.mxu0 0
        %1579 = vmatprep.subr.bf16.mxu0 0
        %1580 = vmatpush2.bf16.msra.mxu0 0
        %1581 = vmatprep.subr.bf16.mxu0 0
        %1582 = vmatpush2.bf16.msra.mxu0 0
        %1583 = vmatprep.subr.bf16.mxu0 0
        %1584 = vmatpush2.bf16.msra.mxu0 0
        %1585 = vmatprep.subr.bf16.mxu0 0
        %1586 = vmatpush2.bf16.msra.mxu0 0
        %1587 = vmatprep.subr.bf16.mxu0 0
        %1588 = vmatpush2.bf16.msra.mxu0 0
        %1589 = vmatprep.mubr.bf16.mxu0 0
        %1590 = vmatmul.mubr.bf16.gmra.mxu0 %v1504
        %v1591 = vpop.f32.mrf.mxu0
        %v1592 = vadd.f32 %v1508, %v1591
        %v1593 = vpop.f32.mrf.mxu0
        %v1594 = vpop.f32.mrf.mxu0
        %v1595 = vadd.f32 %v1508, %v1594
        %v1596 = vpop.f32.mrf.mxu0
        %1597 = vdwg.mxu0
        %v1598 = vadd.f32 %v1389, %v1592
        %v1599 = vadd.f32 %v1390, %v1595
        %1600 = vst.msk [vmem:[#allocation2] sm:$0xff] %vm291, %v1598
        %1601 = vst.msk [vmem:[#allocation2 + $0x8] sm:$0xff] %vm291, %v1599
        // Predicated region
        $region72: #{transformer_tower.1} parent=31 // pred_check
          %p1602 = pneg %p124
        $region73: #{transformer_tower.1} parent=31 // pred_check_branch
          %1604 = sbr.rel (%p1602) target = $region75
        $region74: #{transformer_tower.1} parent=31 // pred_region
          %s1605 = smul.u32 2, %s20
          %s1607 = ssub.s32 256, 256
          %1608 = vsyncadd [#allocation3], %s1607
          %s1609 = smul.addr %s1605, 128
          %s1610 = scalar_lea.hbm %s4, %s1609
          %s1611 = sshll.u32 [#allocation2], 4
          %s1612 = int_to_ptr.vmem [resolvable:$true] %s1611
          %1617 = dma.vmem_to_hbm [thread:$0]  %s1612, 256, %s1610, [#allocation3], 128, 128, 8
        $region75: #{transformer_tower.1} parent=31 // pred_fallthru
          _
        // Predicated region
        $region76: #{transformer_tower.1} parent=31 // pred_check
          %p1618 = pneg %p124
        $region77: #{transformer_tower.1} parent=31 // pred_check_branch
          %1620 = sbr.rel (%p1618) target = $region79
        $region78: #{transformer_tower.1} parent=31 // pred_region
          %1621 = dma.done [#allocation3], 256
        $region79: #{transformer_tower.1} parent=31 // pred_fallthru
          _
      $region32: #{transformer_tower.1} parent=5 // pred_fallthru
        _
      %p1622 = scmp.le.s32.totalorder 2, %s11
      // Predicated region
      $region80: #{transformer_tower.1} parent=5 // pred_check
        %p1623 = pneg %p1622
      $region81: #{transformer_tower.1} parent=5 // pred_check_branch
        %1625 = sbr.rel (%p1623) target = $region83
      $region82: #{transformer_tower.1} parent=5 // pred_region
        %s1626 = ssub.s32 %s11, 2
      $region83: #{transformer_tower.1} parent=5 // pred_fallthru
        _
    $region6: #{transformer_tower.1} parent=1 // loop_footer
      %s15 = sadd.s32 1, %s11
    $region7: #{transformer_tower.1} parent=1 // loop_footer_branch
      %10 = sbr.rel target = $region3
    $region8: #{transformer_tower.1} parent=1 // loop_exit
      _
    %1627 = vsyncpa [#allocation3], 1
    %s1628 = scalar_lea.sflag [#allocation3], 1
    %1629 = vsyncpa %s1628, 1

</llo_original>
